<compile_context>
chip_gen: v7x
topology: tpu7x:2x2x1
jax: 0.10.0
libtpu: 0.0.40
codegen_flags: <defaults>
</compile_context>

<pallas_src>
import jax
import jax.numpy as jnp
from jax import lax
from jax.experimental import pallas as pl
from jax.experimental.pallas import tpu as pltpu

MAX_SAMPLE = 64 * 64
# TODO(synk): the torch sampling branch (w_g*h_g > max_sample) references the
# nonexistent attribute `self.max_sample` (a bug) and uses torch.randperm; it
# is not reproduced here — style spatial size must stay <= max_sample.


def adaattn_kernel(f_ref, g_ref, vcat_ref, cont_ref, cmean_ref, cinvstd_ref,
                   out_ref):
    """One (batch, content-tile) grid step.

    f_ref      : (1, tq, Ck)            bf16  projected content key tile (positions-major)
    g_ref      : (1, Ck, Ns_pad)        bf16  projected style key (per batch)
    vcat_ref   : (1, 2*Cin+1, Ns_pad)   bf16  [v ; v*v ; 1] (per batch; padded cols are 0)
    cont_ref   : (1, Cin, tq)           f32   content tile (channels-major)
    cmean_ref  : (1, Cin, 1)            f32   hoisted InstanceNorm mean
    cinvstd_ref: (1, Cin, 1)            f32   hoisted InstanceNorm 1/std
    out_ref    : (1, Cin, tq)           f32   lane-dense output tile
    """
    cin = cont_ref.shape[1]

    f = f_ref[0]
    g = g_ref[0]
    vcat = vcat_ref[0]
    cont = cont_ref[0]

    # Attention scores: canonical [M,K] x [K,N] matmul (bf16 operands, f32 acc).
    s = jnp.dot(f, g, preferred_element_type=jnp.float32)           # (tq, Ns_pad)

    # Max-stabilized exp in f32 (v5e-safe). Normalization is deferred past the
    # MXU.  (Padded score columns see g == 0 -> score 0; they only raise the
    # max, never overflow, and their vcat columns are zero so they contribute
    # nothing downstream.)
    s = s - jnp.max(s, axis=-1, keepdims=True)
    e = jnp.exp(s)

    # One fused MXU pass over [v; v*v; 1]:
    #   rows [0, Cin)       -> unnormalized attention-weighted mean
    #   rows [Cin, 2*Cin)   -> unnormalized attention-weighted E[x^2]
    #   row  2*Cin          -> softmax denominator (sum of exp over real cols)
    me = lax.dot_general(
        vcat, e.astype(jnp.bfloat16),
        dimension_numbers=(((1,), (1,)), ((), ())),                  # contract Ns
        preferred_element_type=jnp.float32)                          # (2*Cin+1, tq)

    inv = pl.reciprocal(me[2 * cin:2 * cin + 1], approx=True)        # (1, tq), EUP slot
    mean_t = me[:cin] * inv
    ex2_t = me[cin:2 * cin] * inv
    std_t = jnp.sqrt(jnp.maximum(ex2_t - mean_t * mean_t, 0.0))

    # InstanceNorm of content: full-Nc statistics were hoisted to the wrapper.
    normed = (cont - cmean_ref[0]) * cinvstd_ref[0]

    out_ref[0] = std_t * normed + mean_t                             # (Cin, tq)


def _round_up(x, m):
    return ((x + m - 1) // m) * m


def _pick_tile(nc_pad, ns_pad, cin, ck, vmem_budget=24 * 1024 * 1024):
    """Largest content-position tile dividing nc_pad whose live VMEM fits."""
    def estimate(tq):
        f32b, bf16b = 4, 2
        scores = 2 * tq * ns_pad * f32b                 # s and e live together
        me = (2 * cin + 1) * tq * f32b
        f_tile = 2 * tq * ck * bf16b                    # double-buffered tile inputs
        cont = 2 * cin * tq * f32b
        out = 2 * cin * tq * f32b
        g = 2 * ck * ns_pad * bf16b                     # per-batch operands (pipeline
        vcat = 2 * (2 * cin + 1) * ns_pad * bf16b       #   allocates 2 buffers each)
        return scores + me + f_tile + cont + out + g + vcat

    for cand in (512, 384, 256, 128):
        if nc_pad % cand == 0 and estimate(cand) <= vmem_budget:
            return cand
    return 128  # nc_pad is always a multiple of 128


def adaattn_forward(content, style, content_key, style_key, params):
    """content/content_key: (B, Cin/Ck, H, W); style/style_key: (B, Cin/Ck, Hs, Ws)."""
    wf, bf, wg, bg, wh, bh = params
    B, Cin, H, W = content.shape
    _, Ck, Hs, Ws = style_key.shape
    Nc, Ns = H * W, Hs * Ws
    assert Ns <= MAX_SAMPLE, "randperm sampling branch not implemented"
    assert Nc > 1, "unbiased (ddof=1) InstanceNorm std needs Nc > 1"

    f32 = jnp.float32

    # ---- style-side projections: once per batch (were recomputed Nc/tq times). ----
    k_flat = style_key.reshape(B, Ck, Ns).astype(f32)
    sty_flat = style.reshape(B, Cin, Ns).astype(f32)
    g = jnp.einsum('oc,bcn->bon', wg, k_flat) + bg.reshape(1, Ck, 1)        # (B, Ck, Ns)
    v = jnp.einsum('oc,bcn->bon', wh, sty_flat) + bh.reshape(1, Cin, 1)     # (B, Cin, Ns)
    ones = jnp.ones((B, 1, Ns), f32)
    v_cat = jnp.concatenate([v, v * v, ones], axis=1)                       # (B, 2*Cin+1, Ns)

    # ---- content-side f projection in (positions, channels) layout -> the
    # in-kernel scores matmul is the canonical [tq,Ck] x [Ck,Ns] form. ----
    q_flat = content_key.reshape(B, Ck, Nc).astype(f32)
    fN = jnp.einsum('oc,bcn->bno', wf, q_flat) + bf.reshape(1, 1, Ck)       # (B, Nc, Ck)

    # ---- InstanceNorm statistics hoisted (full-Nc reduction, unbiased std
    # like torch's .std(dim=2) default, + 1e-6). ----
    contT = content.reshape(B, Cin, Nc).astype(f32)
    c_mean = jnp.mean(contT, axis=2, keepdims=True)                         # (B, Cin, 1)
    c_inv_std = 1.0 / (jnp.std(contT, axis=2, ddof=1, keepdims=True) + 1e-6)

    # ---- pad style / content position axes to multiples of 128 (lane-dense).
    # Zero-padded [v; v*v; 1] columns contribute nothing to either the
    # numerators or the denominator, so no score masking is needed. ----
    Ns_pad, Nc_pad = _round_up(Ns, 128), _round_up(Nc, 128)
    if Ns_pad != Ns:
        g = jnp.pad(g, ((0, 0), (0, 0), (0, Ns_pad - Ns)))
        v_cat = jnp.pad(v_cat, ((0, 0), (0, 0), (0, Ns_pad - Ns)))
    if Nc_pad != Nc:
        fN = jnp.pad(fN, ((0, 0), (0, Nc_pad - Nc), (0, 0)))
        contT = jnp.pad(contT, ((0, 0), (0, 0), (0, Nc_pad - Nc)))

    fN = fN.astype(jnp.bfloat16)
    g = g.astype(jnp.bfloat16)
    v_cat = v_cat.astype(jnp.bfloat16)

    tq = _pick_tile(Nc_pad, Ns_pad, Cin, Ck)
    grid = (B, Nc_pad // tq)

    out = pl.pallas_call(
        adaattn_kernel,
        out_shape=jax.ShapeDtypeStruct((B, Cin, Nc_pad), jnp.float32),
        grid_spec=pltpu.PrefetchScalarGridSpec(
            num_scalar_prefetch=0,
            grid=grid,
            in_specs=[
                # varies with (b, i):
                pl.BlockSpec((1, tq, Ck), lambda b, i: (b, i, 0)),             # f tile
                # constant along i (fetched once per batch; candidates for
                # pipeline_mode=pl.Buffered(1) when VMEM-tight, e.g. v7x):
                pl.BlockSpec((1, Ck, Ns_pad), lambda b, i: (b, 0, 0)),         # g
                pl.BlockSpec((1, 2 * Cin + 1, Ns_pad), lambda b, i: (b, 0, 0)),  # [v;v^2;1]
                # varies with (b, i):
                pl.BlockSpec((1, Cin, tq), lambda b, i: (b, 0, i)),            # content tile
                # constant along i:
                pl.BlockSpec((1, Cin, 1), lambda b, i: (b, 0, 0)),             # content mean
                pl.BlockSpec((1, Cin, 1), lambda b, i: (b, 0, 0)),             # content 1/std
            ],
            out_specs=pl.BlockSpec((1, Cin, tq), lambda b, i: (b, 0, i)),
        ),
        compiler_params=pltpu.CompilerParams(
            dimension_semantics=("parallel", "parallel")),
    )(fN, g, v_cat, contT, c_mean, c_inv_std)

    return out[:, :, :Nc].reshape(B, Cin, H, W)


def adaattn_reference(content, style, content_key, style_key, params):
    """Pure-JAX f32 reference mirroring the torch forward exactly."""
    wf, bf, wg, bg, wh, bh = params

    def conv1x1(x, w, b):
        return jnp.einsum('bchw,oc->bohw', x, w) + b.reshape(1, -1, 1, 1)

    FF = conv1x1(content_key, wf, bf)
    G = conv1x1(style_key, wg, bg)
    Hh = conv1x1(style, wh, bh)
    B, Ck, H, W = FF.shape
    _, Cin, Hs, Ws = Hh.shape
    Gf = G.reshape(B, Ck, Hs * Ws)
    v_s = Hh.reshape(B, Cin, Hs * Ws).transpose(0, 2, 1)
    Ff = FF.reshape(B, Ck, H * W).transpose(0, 2, 1)
    S = jax.nn.softmax(Ff @ Gf, axis=-1)
    mean = S @ v_s
    std = jnp.sqrt(jnp.maximum(S @ (v_s ** 2) - mean ** 2, 0.0))
    mean = mean.reshape(B, H, W, Cin).transpose(0, 3, 1, 2)
    std = std.reshape(B, H, W, Cin).transpose(0, 3, 1, 2)
    c = content.reshape(B, Cin, -1)
    cm = c.mean(axis=2).reshape(B, Cin, 1, 1)
    cs = jnp.std(c, axis=2, ddof=1).reshape(B, Cin, 1, 1) + 1e-6
    return std * (content - cm) / cs + mean


if __name__ == "__main__":
    key = jax.random.PRNGKey(0)
    # NOTE: real AdaAttN uses channel widths of 256-512+; Cin=Ck=32 keeps the
    # demo small while avoiding the degenerate 8-wide channel case.
    B, Cin, Ck = 2, 32, 32
    H = W = 32       # content spatial -> Nc = 1024 (tiled; grid = (B, Nc/tq))
    Hs = Ws = 8      # style spatial   -> Ns = 64, padded to 128 (< max_sample)

    ks = jax.random.split(key, 10)
    content = jax.random.normal(ks[0], (B, Cin, H, W), jnp.float32)
    style = jax.random.normal(ks[1], (B, Cin, Hs, Ws), jnp.float32)
    content_key = jax.random.normal(ks[2], (B, Ck, H, W), jnp.float32)
    style_key = jax.random.normal(ks[3], (B, Ck, Hs, Ws), jnp.float32)

    # Deterministic parameter init (Conv2d 1x1 weights collapsed to (Cout, Cin)).
    wf = jax.random.normal(ks[4], (Ck, Ck), jnp.float32) * 0.1
    bf = jax.random.normal(ks[5], (Ck,), jnp.float32) * 0.1
    wg = jax.random.normal(ks[6], (Ck, Ck), jnp.float32) * 0.1
    bg = jax.random.normal(ks[7], (Ck,), jnp.float32) * 0.1
    wh = jax.random.normal(ks[8], (Cin, Cin), jnp.float32) * 0.1
    bh = jax.random.normal(ks[9], (Cin,), jnp.float32) * 0.1
    params = (wf, bf, wg, bg, wh, bh)

    out = adaattn_forward(content, style, content_key, style_key, params)
    out = jax.block_until_ready(out)
    assert out.shape == (B, Cin, H, W)

    ref = adaattn_reference(content, style, content_key, style_key, params)
    # bf16 MXU operands (scores, exp weights, [v;v^2;1]) + EUP approx reciprocal
    # + the E[x^2]-mean^2 cancellation -> looser tolerance vs the f32 reference.
    max_diff = float(jnp.max(jnp.abs(out - ref)))
    assert jnp.allclose(out, ref, rtol=5e-2, atol=5e-2), (
        "mismatch vs reference, max abs diff = %s" % max_diff)

    print("KERNEL_OK")
</pallas_src>

<mosaic_0001>
module attributes {stable_mosaic.version = 11 : i64} {
  func.func @adaattn_kernel(%arg0: i32, %arg1: i32, %arg2: memref<1x512x32xbf16, #tpu.memory_space<vmem>>, %arg3: memref<1x32x128xbf16, #tpu.memory_space<vmem>>, %arg4: memref<1x65x128xbf16, #tpu.memory_space<vmem>>, %arg5: memref<1x32x512xf32, #tpu.memory_space<vmem>>, %arg6: memref<1x32x1xf32, #tpu.memory_space<vmem>>, %arg7: memref<1x32x1xf32, #tpu.memory_space<vmem>>, %arg8: memref<1x32x512xf32, #tpu.memory_space<vmem>>) attributes {dimension_semantics = [#tpu.dimension_semantics<parallel>, #tpu.dimension_semantics<parallel>], iteration_bounds = array<i64: 2, 2>, scalar_prefetch = 0 : i64, scratch_operands = 0 : i64, tpu.core_type = #tpu.core_type<tc>, window_params = [{transform_indices = @transform_0, window_bounds = array<i64: 1, 512, 32>}, {transform_indices = @transform_1, window_bounds = array<i64: 1, 32, 128>}, {transform_indices = @transform_2, window_bounds = array<i64: 1, 65, 128>}, {transform_indices = @transform_3, window_bounds = array<i64: 1, 32, 512>}, {transform_indices = @transform_4, window_bounds = array<i64: 1, 32, 1>}, {transform_indices = @transform_5, window_bounds = array<i64: 1, 32, 1>}, {transform_indices = @transform_6, window_bounds = array<i64: 1, 32, 512>}]} {
    %c0 = arith.constant 0 : index
    %c0_0 = arith.constant 0 : index
    %c0_1 = arith.constant 0 : index
    %0 = vector.load %arg2[%c0, %c0_0, %c0_1] : memref<1x512x32xbf16, #tpu.memory_space<vmem>>, vector<1x512x32xbf16>
    %1 = vector.shape_cast %0 : vector<1x512x32xbf16> to vector<512x32xbf16>
    %c0_2 = arith.constant 0 : index
    %c0_3 = arith.constant 0 : index
    %c0_4 = arith.constant 0 : index
    %2 = vector.load %arg3[%c0_2, %c0_3, %c0_4] : memref<1x32x128xbf16, #tpu.memory_space<vmem>>, vector<1x32x128xbf16>
    %3 = vector.shape_cast %2 : vector<1x32x128xbf16> to vector<32x128xbf16>
    %c0_5 = arith.constant 0 : index
    %c0_6 = arith.constant 0 : index
    %c0_7 = arith.constant 0 : index
    %4 = vector.load %arg4[%c0_5, %c0_6, %c0_7] : memref<1x65x128xbf16, #tpu.memory_space<vmem>>, vector<1x65x128xbf16>
    %5 = vector.shape_cast %4 : vector<1x65x128xbf16> to vector<65x128xbf16>
    %c0_8 = arith.constant 0 : index
    %c0_9 = arith.constant 0 : index
    %c0_10 = arith.constant 0 : index
    %6 = vector.load %arg5[%c0_8, %c0_9, %c0_10] : memref<1x32x512xf32, #tpu.memory_space<vmem>>, vector<1x32x512xf32>
    %7 = vector.shape_cast %6 : vector<1x32x512xf32> to vector<32x512xf32>
    %cst = arith.constant dense<0.000000e+00> : vector<512x128xf32>
    %8 = tpu.matmul %1, %3, %cst {dimension_numbers = #tpu.dot_dimension_numbers<[1], [0], [0], [1], [0, 0, 1, 1], [], []>} : vector<512x32xbf16>, vector<32x128xbf16>, vector<512x128xf32> -> vector<512x128xf32>
    %cst_11 = arith.constant dense<0xFF800000> : vector<512xf32>
    %9 = vector.multi_reduction <maximumf>, %8, %cst_11 [1] : vector<512x128xf32> to vector<512xf32>
    %10 = vector.shape_cast %9 : vector<512xf32> to vector<512x1xf32>
    %11 = vector.broadcast %10 : vector<512x1xf32> to vector<512x128xf32>
    %12 = arith.subf %8, %11 : vector<512x128xf32>
    %13 = math.exp %12 : vector<512x128xf32>
    %14 = arith.truncf %13 : vector<512x128xf32> to vector<512x128xbf16>
    %cst_12 = arith.constant dense<0.000000e+00> : vector<65x512xf32>
    %15 = tpu.matmul %5, %14, %cst_12 {dimension_numbers = #tpu.dot_dimension_numbers<[1], [1], [0], [0], [0, 0, 1, 0], [], []>} : vector<65x128xbf16>, vector<512x128xbf16>, vector<65x512xf32> -> vector<65x512xf32>
    %16 = vector.extract_strided_slice %15 {offsets = [64, 0], sizes = [1, 512], strides = [1, 1]} : vector<65x512xf32> to vector<1x512xf32>
    %17 = tpu.reciprocal %16 {approx = true} : vector<1x512xf32> -> vector<1x512xf32>
    %18 = vector.extract_strided_slice %15 {offsets = [0, 0], sizes = [32, 512], strides = [1, 1]} : vector<65x512xf32> to vector<32x512xf32>
    %19 = vector.broadcast %17 : vector<1x512xf32> to vector<32x512xf32>
    %20 = arith.mulf %18, %19 : vector<32x512xf32>
    %21 = vector.extract_strided_slice %15 {offsets = [32, 0], sizes = [32, 512], strides = [1, 1]} : vector<65x512xf32> to vector<32x512xf32>
    %22 = vector.broadcast %17 : vector<1x512xf32> to vector<32x512xf32>
    %23 = arith.mulf %21, %22 : vector<32x512xf32>
    %24 = arith.mulf %20, %20 : vector<32x512xf32>
    %25 = arith.subf %23, %24 : vector<32x512xf32>
    %cst_13 = arith.constant 0.000000e+00 : f32
    %26 = vector.broadcast %cst_13 : f32 to vector<32x512xf32>
    %27 = arith.maximumf %25, %26 : vector<32x512xf32>
    %28 = math.sqrt %27 : vector<32x512xf32>
    %c0_14 = arith.constant 0 : index
    %c0_15 = arith.constant 0 : index
    %c0_16 = arith.constant 0 : index
    %29 = vector.load %arg6[%c0_14, %c0_15, %c0_16] : memref<1x32x1xf32, #tpu.memory_space<vmem>>, vector<1x32x1xf32>
    %30 = vector.shape_cast %29 : vector<1x32x1xf32> to vector<32x1xf32>
    %31 = vector.broadcast %30 : vector<32x1xf32> to vector<32x512xf32>
    %32 = arith.subf %7, %31 : vector<32x512xf32>
    %c0_17 = arith.constant 0 : index
    %c0_18 = arith.constant 0 : index
    %c0_19 = arith.constant 0 : index
    %33 = vector.load %arg7[%c0_17, %c0_18, %c0_19] : memref<1x32x1xf32, #tpu.memory_space<vmem>>, vector<1x32x1xf32>
    %34 = vector.shape_cast %33 : vector<1x32x1xf32> to vector<32x1xf32>
    %35 = vector.broadcast %34 : vector<32x1xf32> to vector<32x512xf32>
    %36 = arith.mulf %32, %35 : vector<32x512xf32>
    %37 = arith.mulf %28, %36 : vector<32x512xf32>
    %38 = arith.addf %37, %20 : vector<32x512xf32>
    %c0_20 = arith.constant 0 : index
    %c0_21 = arith.constant 0 : index
    %c0_22 = arith.constant 0 : index
    %39 = vector.load %arg8[%c0_20, %c0_21, %c0_22] : memref<1x32x512xf32, #tpu.memory_space<vmem>>, vector<1x32x512xf32>
    %40 = vector.shape_cast %39 : vector<1x32x512xf32> to vector<32x512xf32>
    %41 = vector.shape_cast %38 : vector<32x512xf32> to vector<1x32x512xf32>
    tpu.vector_store %arg8[%c0_20, %c0_21, %c0_22], %41 {strides = array<i32>} : memref<1x32x512xf32, #tpu.memory_space<vmem>>, vector<1x32x512xf32>,
    return
  }
  func.func @transform_0(%arg0: i32, %arg1: i32) -> (i32, i32, i32) {
    %c0_i32 = arith.constant 0 : i32
    %c0_i32_0 = arith.constant 0 : i32
    return %arg0, %arg1, %c0_i32 : i32, i32, i32
  }
  func.func @transform_1(%arg0: i32, %arg1: i32) -> (i32, i32, i32) {
    %c0_i32 = arith.constant 0 : i32
    %c0_i32_0 = arith.constant 0 : i32
    %c0_i32_1 = arith.constant 0 : i32
    return %arg0, %c0_i32, %c0_i32_0 : i32, i32, i32
  }
  func.func @transform_2(%arg0: i32, %arg1: i32) -> (i32, i32, i32) {
    %c0_i32 = arith.constant 0 : i32
    %c0_i32_0 = arith.constant 0 : i32
    %c0_i32_1 = arith.constant 0 : i32
    return %arg0, %c0_i32, %c0_i32_0 : i32, i32, i32
  }
  func.func @transform_3(%arg0: i32, %arg1: i32) -> (i32, i32, i32) {
    %c0_i32 = arith.constant 0 : i32
    %c0_i32_0 = arith.constant 0 : i32
    return %arg0, %c0_i32, %arg1 : i32, i32, i32
  }
  func.func @transform_4(%arg0: i32, %arg1: i32) -> (i32, i32, i32) {
    %c0_i32 = arith.constant 0 : i32
    %c0_i32_0 = arith.constant 0 : i32
    %c0_i32_1 = arith.constant 0 : i32
    return %arg0, %c0_i32, %c0_i32_0 : i32, i32, i32
  }
  func.func @transform_5(%arg0: i32, %arg1: i32) -> (i32, i32, i32) {
    %c0_i32 = arith.constant 0 : i32
    %c0_i32_0 = arith.constant 0 : i32
    %c0_i32_1 = arith.constant 0 : i32
    return %arg0, %c0_i32, %c0_i32_0 : i32, i32, i32
  }
  func.func @transform_6(%arg0: i32, %arg1: i32) -> (i32, i32, i32) {
    %c0_i32 = arith.constant 0 : i32
    %c0_i32_0 = arith.constant 0 : i32
    return %arg0, %c0_i32, %arg1 : i32, i32, i32
  }
}

</mosaic_0001>

<llo_original>
// kernel: tpu_custom_call.1
$region0: #{tpu_custom_call.1}
  #allocation0 [shape = 'u32[]', space=smem, size = 0x4, offset = 0x4, fixed_abs, tag = 'smem constant byte address 0x4 - core index']
  #allocation1 [shape = 'u32[144,128]{1,0:T(1,128)}', space=vmem, size = 0x12000, scoped, tag = 'internal scratch']
  %s0 = inlined_call_operand.vmem [shape: bf16[2,1024,32], index: 0, kind: input, shape index: {}]
  %s1 = inlined_call_operand.vmem [shape: bf16[2,32,128], index: 1, kind: input, shape index: {}]
  %s2 = inlined_call_operand.vmem [shape: bf16[2,65,128], index: 2, kind: input, shape index: {}]
  %s3 = inlined_call_operand.vmem [shape: f32[2,32,1024], index: 3, kind: input, shape index: {}]
  %s4 = inlined_call_operand.vmem [shape: f32[2,32,1], index: 4, kind: input, shape index: {}]
  %s5 = inlined_call_operand.vmem [shape: f32[2,32,1], index: 5, kind: input, shape index: {}]
  %s6 = inlined_call_operand.hbm [shape: f32[2,32,1024], index: 6, kind: output, shape index: {}]
  %s7 = sld [smem:[#allocation0]]
  $region80: #{tpu_custom_call.1} parent=0
    _
  %s9 = ssub.s32 1, %s7
  %s10 = scalar_select 0, %s9, %s7
  $region1: #{tpu_custom_call.1} parent=0
    #allocation2 [shape = 'u8[131072]{0}', space=vmem, size = 0x20000, scoped, tag = 'input window, operand 3']
    #allocation3 [shape = 'u8[131072]{0}', space=vmem, size = 0x20000, scoped, tag = 'output window, operand 0']
    #allocation4 [shape = 's32[2]{0}', space=sflag, size = 0x8, scoped, tag = 'scoped memory for tpu_custom_call.1']
    %11 = vsyncpa [#allocation4], 0
    %s12 = scalar_lea.sflag [#allocation4], 1
    %13 = vsyncpa %s12, 0
    loop: start=0, step=1, limit=6
    $region2: #{tpu_custom_call.1} parent=1 // loop_pre_header
      _
    $region3: #{tpu_custom_call.1} parent=1 // loop_header
      %s15 = sphi 0, %s19
      %p16 = scmp.ge.s32.totalorder %s15, 6
      %s22 = sphi 0, %s34
      %s23 = sphi 0, %s30
      %s24 = sphi 0, %s22
      %s25 = sphi 0, %s23
      %s26 = sphi 0, %s24
      %s27 = sphi 0, %s25
      %s39 = sphi 0, %s41
      %s42 = sphi 0, %s39
      %s43 = sphi 0, %s42
      %s59 = sphi 0, %s43
      %s65 = sphi 0, %s67
      %s68 = sphi 0, %s65
      %s69 = sphi 0, %s68
      %s85 = sphi 0, %s69
      %s91 = sphi 0, %s93
      %s94 = sphi 0, %s91
      %s95 = sphi 0, %s94
      %s111 = sphi 0, %s95
      %s119 = sphi 0, %s121
      %s122 = sphi 0, %s119
      %s123 = sphi 0, %s122
      %s139 = sphi 0, %s123
      %s145 = sphi 0, %s147
      %s148 = sphi 0, %s145
      %s149 = sphi 0, %s148
      %s165 = sphi 0, %s149
      %s171 = sphi 0, %s173
      %s174 = sphi 0, %s171
      %s175 = sphi 0, %s174
      %s191 = sphi 0, %s175
      %s199 = sphi 0, %s201
      %s202 = sphi 0, %s199
      %s203 = sphi 0, %s202
      %s219 = sphi 0, %s203
    $region4: #{tpu_custom_call.1} parent=1 // loop_header_branch
      %18 = sbr.rel (%p16) target = $region8
    $region5: #{tpu_custom_call.1} parent=1 // loop_body
      %s20 = ssub.s32 %s15, 1
      %s21 = ssub.s32 %s15, 2
      %s28 = sadd.s32 1, %s23
      %p29 = scmp.ge.s32.totalorder %s28, 2
      %s30 = scalar_select %p29, 0, %s28
      %s31 = sadd.s32 1, %s22
      %s32 = scalar_select %p29, %s31, %s22
      %p33 = scmp.ge.s32.totalorder %s32, 2
      %s34 = scalar_select %p33, 0, %s32
      %s35 = ssub.s32 %s22, %s34
      %s36 = ssub.s32 %s23, %s30
      %s37 = sor.u32 %s35, %s36
      %p38 = scmp.eq.s32.totalorder %s37, 0
      %s40 = sadd.s32 %s39, 1
      %s41 = scalar_select %p38, %s39, %s40
      %p44 = pneg %p38
      %p45 = scmp.eq.s32.totalorder %s15, 3
      %p46 = por %p44, %p45
      %p47 = scmp.ne.s32.totalorder %s39, %s42
      %p48 = scmp.eq.s32.totalorder %s15, 0
      %p49 = por %p47, %p48
      %p50 = scmp.ne.s32.totalorder %s39, %s42
      %p51 = scmp.eq.s32.totalorder %s20, 3
      %p52 = por %p50, %p51
      %p53 = scmp.ne.s32.totalorder %s42, %s43
      %p54 = scmp.eq.s32.totalorder %s20, 0
      %p55 = por %p53, %p54
      %p56 = scmp.ne.s32.totalorder %s42, %s43
      %p57 = scmp.eq.s32.totalorder %s21, 3
      %p58 = por %p56, %p57
      %p60 = scmp.ne.s32.totalorder %s43, %s59
      %p61 = scmp.eq.s32.totalorder %s21, 0
      %p62 = por %p60, %p61
      %s63 = ssub.s32 %s22, %s34
      %p64 = scmp.eq.s32.totalorder %s63, 0
      %s66 = sadd.s32 %s65, 1
      %s67 = scalar_select %p64, %s65, %s66
      %p70 = pneg %p64
      %p71 = scmp.eq.s32.totalorder %s15, 3
      %p72 = por %p70, %p71
      %p73 = scmp.ne.s32.totalorder %s65, %s68
      %p74 = scmp.eq.s32.totalorder %s15, 0
      %p75 = por %p73, %p74
      %p76 = scmp.ne.s32.totalorder %s65, %s68
      %p77 = scmp.eq.s32.totalorder %s20, 3
      %p78 = por %p76, %p77
      %p79 = scmp.ne.s32.totalorder %s68, %s69
      %p80 = scmp.eq.s32.totalorder %s20, 0
      %p81 = por %p79, %p80
      %p82 = scmp.ne.s32.totalorder %s68, %s69
      %p83 = scmp.eq.s32.totalorder %s21, 3
      %p84 = por %p82, %p83
      %p86 = scmp.ne.s32.totalorder %s69, %s85
      %p87 = scmp.eq.s32.totalorder %s21, 0
      %p88 = por %p86, %p87
      %s89 = ssub.s32 %s22, %s34
      %p90 = scmp.eq.s32.totalorder %s89, 0
      %s92 = sadd.s32 %s91, 1
      %s93 = scalar_select %p90, %s91, %s92
      %p96 = pneg %p90
      %p97 = scmp.eq.s32.totalorder %s15, 3
      %p98 = por %p96, %p97
      %p99 = scmp.ne.s32.totalorder %s91, %s94
      %p100 = scmp.eq.s32.totalorder %s15, 0
      %p101 = por %p99, %p100
      %p102 = scmp.ne.s32.totalorder %s91, %s94
      %p103 = scmp.eq.s32.totalorder %s20, 3
      %p104 = por %p102, %p103
      %p105 = scmp.ne.s32.totalorder %s94, %s95
      %p106 = scmp.eq.s32.totalorder %s20, 0
      %p107 = por %p105, %p106
      %p108 = scmp.ne.s32.totalorder %s94, %s95
      %p109 = scmp.eq.s32.totalorder %s21, 3
      %p110 = por %p108, %p109
      %p112 = scmp.ne.s32.totalorder %s95, %s111
      %p113 = scmp.eq.s32.totalorder %s21, 0
      %p114 = por %p112, %p113
      %s115 = ssub.s32 %s22, %s34
      %s116 = ssub.s32 %s23, %s30
      %s117 = sor.u32 %s115, %s116
      %p118 = scmp.eq.s32.totalorder %s117, 0
      %s120 = sadd.s32 %s119, 1
      %s121 = scalar_select %p118, %s119, %s120
      %p124 = pneg %p118
      %p125 = scmp.eq.s32.totalorder %s15, 3
      %p126 = por %p124, %p125
      %p127 = scmp.ne.s32.totalorder %s119, %s122
      %p128 = scmp.eq.s32.totalorder %s15, 0
      %p129 = por %p127, %p128
      %p130 = scmp.ne.s32.totalorder %s119, %s122
      %p131 = scmp.eq.s32.totalorder %s20, 3
      %p132 = por %p130, %p131
      %p133 = scmp.ne.s32.totalorder %s122, %s123
      %p134 = scmp.eq.s32.totalorder %s20, 0
      %p135 = por %p133, %p134
      %p136 = scmp.ne.s32.totalorder %s122, %s123
      %p137 = scmp.eq.s32.totalorder %s21, 3
      %p138 = por %p136, %p137
      %p140 = scmp.ne.s32.totalorder %s123, %s139
      %p141 = scmp.eq.s32.totalorder %s21, 0
      %p142 = por %p140, %p141
      %s143 = ssub.s32 %s22, %s34
      %p144 = scmp.eq.s32.totalorder %s143, 0
      %s146 = sadd.s32 %s145, 1
      %s147 = scalar_select %p144, %s145, %s146
      %p150 = pneg %p144
      %p151 = scmp.eq.s32.totalorder %s15, 3
      %p152 = por %p150, %p151
      %p153 = scmp.ne.s32.totalorder %s145, %s148
      %p154 = scmp.eq.s32.totalorder %s15, 0
      %p155 = por %p153, %p154
      %p156 = scmp.ne.s32.totalorder %s145, %s148
      %p157 = scmp.eq.s32.totalorder %s20, 3
      %p158 = por %p156, %p157
      %p159 = scmp.ne.s32.totalorder %s148, %s149
      %p160 = scmp.eq.s32.totalorder %s20, 0
      %p161 = por %p159, %p160
      %p162 = scmp.ne.s32.totalorder %s148, %s149
      %p163 = scmp.eq.s32.totalorder %s21, 3
      %p164 = por %p162, %p163
      %p166 = scmp.ne.s32.totalorder %s149, %s165
      %p167 = scmp.eq.s32.totalorder %s21, 0
      %p168 = por %p166, %p167
      %s169 = ssub.s32 %s22, %s34
      %p170 = scmp.eq.s32.totalorder %s169, 0
      %s172 = sadd.s32 %s171, 1
      %s173 = scalar_select %p170, %s171, %s172
      %p176 = pneg %p170
      %p177 = scmp.eq.s32.totalorder %s15, 3
      %p178 = por %p176, %p177
      %p179 = scmp.ne.s32.totalorder %s171, %s174
      %p180 = scmp.eq.s32.totalorder %s15, 0
      %p181 = por %p179, %p180
      %p182 = scmp.ne.s32.totalorder %s171, %s174
      %p183 = scmp.eq.s32.totalorder %s20, 3
      %p184 = por %p182, %p183
      %p185 = scmp.ne.s32.totalorder %s174, %s175
      %p186 = scmp.eq.s32.totalorder %s20, 0
      %p187 = por %p185, %p186
      %p188 = scmp.ne.s32.totalorder %s174, %s175
      %p189 = scmp.eq.s32.totalorder %s21, 3
      %p190 = por %p188, %p189
      %p192 = scmp.ne.s32.totalorder %s175, %s191
      %p193 = scmp.eq.s32.totalorder %s21, 0
      %p194 = por %p192, %p193
      %s195 = ssub.s32 %s22, %s34
      %s196 = ssub.s32 %s23, %s30
      %s197 = sor.u32 %s195, %s196
      %p198 = scmp.eq.s32.totalorder %s197, 0
      %s200 = sadd.s32 %s199, 1
      %s201 = scalar_select %p198, %s199, %s200
      %p204 = pneg %p198
      %p205 = scmp.eq.s32.totalorder %s15, 3
      %p206 = por %p204, %p205
      %p207 = scmp.ne.s32.totalorder %s199, %s202
      %p208 = scmp.eq.s32.totalorder %s15, 0
      %p209 = por %p207, %p208
      %p210 = scmp.ne.s32.totalorder %s199, %s202
      %p211 = scmp.eq.s32.totalorder %s20, 3
      %p212 = por %p210, %p211
      %p213 = scmp.ne.s32.totalorder %s202, %s203
      %p214 = scmp.eq.s32.totalorder %s20, 0
      %p215 = por %p213, %p214
      %p216 = scmp.ne.s32.totalorder %s202, %s203
      %p217 = scmp.eq.s32.totalorder %s21, 3
      %p218 = por %p216, %p217
      %p220 = scmp.ne.s32.totalorder %s203, %s219
      %p221 = scmp.eq.s32.totalorder %s21, 0
      %p222 = por %p220, %p221
      %p223 = scmp.le.s32.totalorder 1, %s15
      %p224 = scmp.lt.s32.totalorder %s15, 5
      %p225 = pnand %p223, %p224
      %p226 = pneg %p225
      // Predicated region
      $region9: #{tpu_custom_call.1} parent=5 // pred_check
        _
      $region10: #{tpu_custom_call.1} parent=5 // pred_check_branch
        %228 = sbr.rel (%p225) target = $region12
      $region11: #{tpu_custom_call.1} parent=5 // pred_region
        %s229 = ssub.s32 %s15, 1
      $region12: #{tpu_custom_call.1} parent=5 // pred_fallthru
        _
      %p230 = scmp.lt.s32.totalorder %s15, 4
      // Predicated region
      $region13: #{tpu_custom_call.1} parent=5 // pred_check
        %p231 = pneg %p230
      $region14: #{tpu_custom_call.1} parent=5 // pred_check_branch
        %233 = sbr.rel (%p231) target = $region16
      $region15: #{tpu_custom_call.1} parent=5 // pred_region
        // Predicated region
        $region17: #{tpu_custom_call.1} parent=15 // pred_check
          %p234 = pneg %p49
        $region18: #{tpu_custom_call.1} parent=15 // pred_check_branch
          %236 = sbr.rel (%p234) target = $region20
        $region19: #{tpu_custom_call.1} parent=15 // pred_region
          %s237 = smul.u32 64, %s23
          %p238 = scmp.lt.s32.totalorder %s22, 1
          %s239 = scalar_select %p238, %s22, 1
          %p240 = scmp.lt.s32.totalorder %s237, 127
          %s241 = scalar_select %p240, %s237, 127
          %s242 = smul.addr %s239, 128
          %s243 = sadd.s32 %s241, %s242
          %s244 = smul.addr %s243, 4
          %s245 = scalar_lea.vmem %s0, %s244
          %s246 = smul.u32 64, %s23
        $region20: #{tpu_custom_call.1} parent=15 // pred_fallthru
          _
        // Predicated region
        $region21: #{tpu_custom_call.1} parent=15 // pred_check
          %p247 = pneg %p75
        $region22: #{tpu_custom_call.1} parent=15 // pred_check_branch
          %249 = sbr.rel (%p247) target = $region24
        $region23: #{tpu_custom_call.1} parent=15 // pred_region
          %p250 = scmp.lt.s32.totalorder %s22, 1
          %s251 = scalar_select %p250, %s22, 1
          %s252 = smul.addr %s251, 4
          %s253 = smul.addr %s252, 4
          %s254 = scalar_lea.vmem %s1, %s253
        $region24: #{tpu_custom_call.1} parent=15 // pred_fallthru
          _
        // Predicated region
        $region25: #{tpu_custom_call.1} parent=15 // pred_check
          %p255 = pneg %p101
        $region26: #{tpu_custom_call.1} parent=15 // pred_check_branch
          %257 = sbr.rel (%p255) target = $region28
        $region27: #{tpu_custom_call.1} parent=15 // pred_region
          %p258 = scmp.lt.s32.totalorder %s22, 1
          %s259 = scalar_select %p258, %s22, 1
          %s260 = smul.addr %s259, 9
          %s261 = smul.addr %s260, 4
          %s262 = scalar_lea.vmem %s2, %s261
        $region28: #{tpu_custom_call.1} parent=15 // pred_fallthru
          _
        // Predicated region
        $region29: #{tpu_custom_call.1} parent=15 // pred_check
          %p263 = pneg %p129
        $region30: #{tpu_custom_call.1} parent=15 // pred_check_branch
          %265 = sbr.rel (%p263) target = $region32
        $region31: #{tpu_custom_call.1} parent=15 // pred_region
          %s266 = sand.u32 %s119, 1
          %s267 = sand.u32 %s119, 1
          %s268 = smul.addr %s267, 128
          %s269 = scalar_lea.vmem [#allocation2], %s268
          %s270 = smul.u32 4, %s23
          %s271 = smul.addr %s22, 32
          %s272 = sadd.s32 %s270, %s271
          %s273 = smul.addr %s272, 8
          %s274 = scalar_lea.vmem %s3, %s273
          // Predicated region
          $region33: #{tpu_custom_call.1} parent=31 // pred_check
            _
          $region34: #{tpu_custom_call.1} parent=31 // pred_check_branch
            %276 = sbr.rel (0) target = $region36
          $region35: #{tpu_custom_call.1} parent=31 // pred_region
            // Predicated region
            $region37: #{tpu_custom_call.1} parent=35 // pred_check
              _
            $region38: #{tpu_custom_call.1} parent=35 // pred_check_branch
              %278 = sbr.rel (0) target = $region40
            $region39: #{tpu_custom_call.1} parent=35 // pred_region
              loop: start=0, step=1, limit=1
              $region41: #{tpu_custom_call.1} parent=39 // loop_pre_header
                _
              $region42: #{tpu_custom_call.1} parent=39 // loop_header
                %s280 = sphi 0, %s284
                %p281 = scmp.ge.s32.totalorder %s280, 1
                %s285 = sphi %s274, %s274
                %s286 = sphi %s269, %s269
              $region43: #{tpu_custom_call.1} parent=39 // loop_header_branch
                %283 = sbr.rel (%p281) target = $region47
              $region44: #{tpu_custom_call.1} parent=39 // loop_body
                %v287 = vld [vmem:[%s285] sm:$0xff]
                %288 = vst [vmem:[%s286] sm:$0xff] %v287
                %v289 = vld [vmem:[%s285 + $0x8] sm:$0xff]
                %290 = vst [vmem:[%s286 + $0x8] sm:$0xff] %v289
                %v291 = vld [vmem:[%s285 + $0x10] sm:$0xff]
                %292 = vst [vmem:[%s286 + $0x10] sm:$0xff] %v291
                %v293 = vld [vmem:[%s285 + $0x18] sm:$0xff]
                %294 = vst [vmem:[%s286 + $0x18] sm:$0xff] %v293
                %v295 = vld [vmem:[%s285 + $0x40] sm:$0xff]
                %296 = vst [vmem:[%s286 + $0x20] sm:$0xff] %v295
                %v297 = vld [vmem:[%s285 + $0x48] sm:$0xff]
                %298 = vst [vmem:[%s286 + $0x28] sm:$0xff] %v297
                %v299 = vld [vmem:[%s285 + $0x50] sm:$0xff]
                %300 = vst [vmem:[%s286 + $0x30] sm:$0xff] %v299
                %v301 = vld [vmem:[%s285 + $0x58] sm:$0xff]
                %302 = vst [vmem:[%s286 + $0x38] sm:$0xff] %v301
                %v303 = vld [vmem:[%s285 + $0x80] sm:$0xff]
                %304 = vst [vmem:[%s286 + $0x40] sm:$0xff] %v303
                %v305 = vld [vmem:[%s285 + $0x88] sm:$0xff]
                %306 = vst [vmem:[%s286 + $0x48] sm:$0xff] %v305
                %v307 = vld [vmem:[%s285 + $0x90] sm:$0xff]
                %308 = vst [vmem:[%s286 + $0x50] sm:$0xff] %v307
                %v309 = vld [vmem:[%s285 + $0x98] sm:$0xff]
                %310 = vst [vmem:[%s286 + $0x58] sm:$0xff] %v309
                %v311 = vld [vmem:[%s285 + $0xc0] sm:$0xff]
                %312 = vst [vmem:[%s286 + $0x60] sm:$0xff] %v311
                %v313 = vld [vmem:[%s285 + $0xc8] sm:$0xff]
                %314 = vst [vmem:[%s286 + $0x68] sm:$0xff] %v313
                %v315 = vld [vmem:[%s285 + $0xd0] sm:$0xff]
                %316 = vst [vmem:[%s286 + $0x70] sm:$0xff] %v315
                %v317 = vld [vmem:[%s285 + $0xd8] sm:$0xff]
                %318 = vst [vmem:[%s286 + $0x78] sm:$0xff] %v317
              $region45: #{tpu_custom_call.1} parent=39 // loop_footer
                %s284 = sadd.s32 1, %s280
              $region46: #{tpu_custom_call.1} parent=39 // loop_footer_branch
                %279 = sbr.rel target = $region42
              $region47: #{tpu_custom_call.1} parent=39 // loop_exit
                _
            $region40: #{tpu_custom_call.1} parent=35 // pred_fallthru
              _
            // Predicated region
            $region48: #{tpu_custom_call.1} parent=35 // pred_check
              _
            $region49: #{tpu_custom_call.1} parent=35 // pred_check_branch
              %320 = sbr.rel target = $region51
            $region50: #{tpu_custom_call.1} parent=35 // pred_region
              _
            $region51: #{tpu_custom_call.1} parent=35 // pred_fallthru
              _
          $region36: #{tpu_custom_call.1} parent=31 // pred_fallthru
            _
          %321 = vnop
        $region32: #{tpu_custom_call.1} parent=15 // pred_fallthru
          _
        // Predicated region
        $region52: #{tpu_custom_call.1} parent=15 // pred_check
          %p322 = pneg %p155
        $region53: #{tpu_custom_call.1} parent=15 // pred_check_branch
          %324 = sbr.rel (%p322) target = $region55
        $region54: #{tpu_custom_call.1} parent=15 // pred_region
          %p325 = scmp.lt.s32.totalorder %s22, 1
          %s326 = scalar_select %p325, %s22, 1
          %s327 = smul.addr %s326, 4
          %s328 = smul.addr %s327, 8
          %s329 = scalar_lea.vmem %s4, %s328
        $region55: #{tpu_custom_call.1} parent=15 // pred_fallthru
          _
        // Predicated region
        $region56: #{tpu_custom_call.1} parent=15 // pred_check
          %p330 = pneg %p181
        $region57: #{tpu_custom_call.1} parent=15 // pred_check_branch
          %332 = sbr.rel (%p330) target = $region59
        $region58: #{tpu_custom_call.1} parent=15 // pred_region
          %p333 = scmp.lt.s32.totalorder %s22, 1
          %s334 = scalar_select %p333, %s22, 1
          %s335 = smul.addr %s334, 4
          %s336 = smul.addr %s335, 8
          %s337 = scalar_lea.vmem %s5, %s336
        $region59: #{tpu_custom_call.1} parent=15 // pred_fallthru
          _
      $region16: #{tpu_custom_call.1} parent=5 // pred_fallthru
        _
      %p338 = scmp.le.s32.totalorder 1, %s15
      %p339 = scmp.lt.s32.totalorder %s15, 5
      %p340 = pnand %p338, %p339
      %p341 = pneg %p340
      // Predicated region
      $region60: #{tpu_custom_call.1} parent=5 // pred_check
        _
      $region61: #{tpu_custom_call.1} parent=5 // pred_check_branch
        %343 = sbr.rel (%p340) target = $region63
      $region62: #{tpu_custom_call.1} parent=5 // pred_region
        %s344 = ssub.s32 %s15, 1
        %s345 = sand.u32 %s122, 1
        %s346 = sand.u32 %s122, 1
        %s347 = smul.addr %s346, 128
        %s348 = scalar_lea.vmem [#allocation2], %s347
        // Predicated region
        $region64: #{tpu_custom_call.1} parent=62 // pred_check
          %p349 = pneg %p135
        $region65: #{tpu_custom_call.1} parent=62 // pred_check_branch
          %351 = sbr.rel (%p349) target = $region67
        $region66: #{tpu_custom_call.1} parent=62 // pred_region
          _
        $region67: #{tpu_custom_call.1} parent=62 // pred_fallthru
          _
        %s352 = smul.u32 64, %s25
        %p353 = scmp.lt.s32.totalorder %s24, 1
        %s354 = scalar_select %p353, %s24, 1
        %p355 = scmp.lt.s32.totalorder %s352, 127
        %s356 = scalar_select %p355, %s352, 127
        %s357 = smul.addr %s354, 128
        %s358 = sadd.s32 %s356, %s357
        %s359 = smul.addr %s358, 4
        %s360 = scalar_lea.vmem %s0, %s359
        %p361 = pneg %p55
        %p362 = pneg %p52
        %p363 = scmp.lt.s32.totalorder %s24, 1
        %s364 = scalar_select %p363, %s24, 1
        %s365 = smul.addr %s364, 4
        %s366 = smul.addr %s365, 4
        %s367 = scalar_lea.vmem %s1, %s366
        %p368 = pneg %p81
        %p369 = pneg %p78
        %p370 = scmp.lt.s32.totalorder %s24, 1
        %s371 = scalar_select %p370, %s24, 1
        %s372 = smul.addr %s371, 9
        %s373 = smul.addr %s372, 4
        %s374 = scalar_lea.vmem %s2, %s373
        %p375 = pneg %p107
        %p376 = pneg %p104
        %s377 = sand.u32 %s122, 1
        %s378 = sand.u32 %s122, 1
        %s379 = smul.addr %s378, 128
        %s380 = scalar_lea.vmem [#allocation2], %s379
        %p381 = pneg %p135
        %p382 = pneg %p132
        %p383 = scmp.lt.s32.totalorder %s24, 1
        %s384 = scalar_select %p383, %s24, 1
        %s385 = smul.addr %s384, 4
        %s386 = smul.addr %s385, 8
        %s387 = scalar_lea.vmem %s4, %s386
        %p388 = pneg %p161
        %p389 = pneg %p158
        %p390 = scmp.lt.s32.totalorder %s24, 1
        %s391 = scalar_select %p390, %s24, 1
        %s392 = smul.addr %s391, 4
        %s393 = smul.addr %s392, 8
        %s394 = scalar_lea.vmem %s5, %s393
        %p395 = pneg %p187
        %p396 = pneg %p184
        %p397 = pneg %p215
        %p398 = pneg %p212
        %s399 = sand.u32 %s202, 1
        %s400 = scalar_lea.sflag [#allocation4], %s399
        %s401 = sand.u32 %s202, 1
        %s402 = smul.addr %s401, 128
        %s403 = scalar_lea.vmem [#allocation3], %s402
        %s404 = smul.u32 64, %s25
        %p405 = scmp.lt.s32.totalorder %s24, 1
        %s406 = scalar_select %p405, %s24, 1
        %p407 = scmp.lt.s32.totalorder %s404, 127
        %s408 = scalar_select %p407, %s404, 127
        %s409 = smul.addr %s406, 128
        %s410 = sadd.s32 %s408, %s409
        %s411 = smul.addr %s410, 4
        %s412 = scalar_lea.vmem %s0, %s411
        %s413 = smul.u32 64, %s25
        %p414 = scmp.lt.s32.totalorder %s24, 1
        %s415 = scalar_select %p414, %s24, 1
        %s416 = smul.addr %s415, 4
        %s417 = smul.addr %s416, 4
        %s418 = scalar_lea.vmem %s1, %s417
        %p419 = scmp.lt.s32.totalorder %s24, 1
        %s420 = scalar_select %p419, %s24, 1
        %s421 = smul.addr %s420, 9
        %s422 = smul.addr %s421, 4
        %s423 = scalar_lea.vmem %s2, %s422
        %s424 = smul.u32 4, %s25
        %p425 = scmp.lt.s32.totalorder %s24, 1
        %s426 = scalar_select %p425, %s24, 1
        %s427 = smul.addr %s426, 4
        %s428 = smul.addr %s427, 8
        %s429 = scalar_lea.vmem %s4, %s428
        %p430 = scmp.lt.s32.totalorder %s24, 1
        %s431 = scalar_select %p430, %s24, 1
        %s432 = smul.addr %s431, 4
        %s433 = smul.addr %s432, 8
        %s434 = scalar_lea.vmem %s5, %s433
        %s435 = smul.u32 4, %s25
        %v437 = vld [vmem:[%s412] sm:$0xf]
        %v438 = vld [vmem:[%s412 + $0x4] sm:$0xf]
        %v439 = vld [vmem:[%s412 + $0x8] sm:$0xf]
        %v440 = vld [vmem:[%s412 + $0xc] sm:$0xf]
        %v441 = vld [vmem:[%s412 + $0x10] sm:$0xf]
        %v442 = vld [vmem:[%s412 + $0x14] sm:$0xf]
        %v443 = vld [vmem:[%s412 + $0x18] sm:$0xf]
        %v444 = vld [vmem:[%s412 + $0x1c] sm:$0xf]
        %v445 = vld [vmem:[%s412 + $0x20] sm:$0xf]
        %v446 = vld [vmem:[%s412 + $0x24] sm:$0xf]
        %v447 = vld [vmem:[%s412 + $0x28] sm:$0xf]
        %v448 = vld [vmem:[%s412 + $0x2c] sm:$0xf]
        %v449 = vld [vmem:[%s412 + $0x30] sm:$0xf]
        %v450 = vld [vmem:[%s412 + $0x34] sm:$0xf]
        %v451 = vld [vmem:[%s412 + $0x38] sm:$0xf]
        %v452 = vld [vmem:[%s412 + $0x3c] sm:$0xf]
        %v453 = vld [vmem:[%s412 + $0x40] sm:$0xf]
        %v454 = vld [vmem:[%s412 + $0x44] sm:$0xf]
        %v455 = vld [vmem:[%s412 + $0x48] sm:$0xf]
        %v456 = vld [vmem:[%s412 + $0x4c] sm:$0xf]
        %v457 = vld [vmem:[%s412 + $0x50] sm:$0xf]
        %v458 = vld [vmem:[%s412 + $0x54] sm:$0xf]
        %v459 = vld [vmem:[%s412 + $0x58] sm:$0xf]
        %v460 = vld [vmem:[%s412 + $0x5c] sm:$0xf]
        %v461 = vld [vmem:[%s412 + $0x60] sm:$0xf]
        %v462 = vld [vmem:[%s412 + $0x64] sm:$0xf]
        %v463 = vld [vmem:[%s412 + $0x68] sm:$0xf]
        %v464 = vld [vmem:[%s412 + $0x6c] sm:$0xf]
        %v465 = vld [vmem:[%s412 + $0x70] sm:$0xf]
        %v466 = vld [vmem:[%s412 + $0x74] sm:$0xf]
        %v467 = vld [vmem:[%s412 + $0x78] sm:$0xf]
        %v468 = vld [vmem:[%s412 + $0x7c] sm:$0xf]
        %v469 = vld [vmem:[%s412 + $0x80] sm:$0xf]
        %v470 = vld [vmem:[%s412 + $0x84] sm:$0xf]
        %v471 = vld [vmem:[%s412 + $0x88] sm:$0xf]
        %v472 = vld [vmem:[%s412 + $0x8c] sm:$0xf]
        %v473 = vld [vmem:[%s412 + $0x90] sm:$0xf]
        %v474 = vld [vmem:[%s412 + $0x94] sm:$0xf]
        %v475 = vld [vmem:[%s412 + $0x98] sm:$0xf]
        %v476 = vld [vmem:[%s412 + $0x9c] sm:$0xf]
        %v477 = vld [vmem:[%s412 + $0xa0] sm:$0xf]
        %v478 = vld [vmem:[%s412 + $0xa4] sm:$0xf]
        %v479 = vld [vmem:[%s412 + $0xa8] sm:$0xf]
        %v480 = vld [vmem:[%s412 + $0xac] sm:$0xf]
        %v481 = vld [vmem:[%s412 + $0xb0] sm:$0xf]
        %v482 = vld [vmem:[%s412 + $0xb4] sm:$0xf]
        %v483 = vld [vmem:[%s412 + $0xb8] sm:$0xf]
        %v484 = vld [vmem:[%s412 + $0xbc] sm:$0xf]
        %v485 = vld [vmem:[%s412 + $0xc0] sm:$0xf]
        %v486 = vld [vmem:[%s412 + $0xc4] sm:$0xf]
        %v487 = vld [vmem:[%s412 + $0xc8] sm:$0xf]
        %v488 = vld [vmem:[%s412 + $0xcc] sm:$0xf]
        %v489 = vld [vmem:[%s412 + $0xd0] sm:$0xf]
        %v490 = vld [vmem:[%s412 + $0xd4] sm:$0xf]
        %v491 = vld [vmem:[%s412 + $0xd8] sm:$0xf]
        %v492 = vld [vmem:[%s412 + $0xdc] sm:$0xf]
        %v493 = vld [vmem:[%s412 + $0xe0] sm:$0xf]
        %v494 = vld [vmem:[%s412 + $0xe4] sm:$0xf]
        %v495 = vld [vmem:[%s412 + $0xe8] sm:$0xf]
        %v496 = vld [vmem:[%s412 + $0xec] sm:$0xf]
        %v497 = vld [vmem:[%s412 + $0xf0] sm:$0xf]
        %v498 = vld [vmem:[%s412 + $0xf4] sm:$0xf]
        %v499 = vld [vmem:[%s412 + $0xf8] sm:$0xf]
        %v500 = vld [vmem:[%s412 + $0xfc] sm:$0xf]
        %v501 = vld [vmem:[%s418] sm:$0xf]
        %v502 = vld [vmem:[%s418 + $0x4] sm:$0xf]
        %v503 = vld [vmem:[%s418 + $0x8] sm:$0xf]
        %v504 = vld [vmem:[%s418 + $0xc] sm:$0xf]
        %v505 = vld [vmem:[%s423] sm:$0xf]
        %v506 = vld [vmem:[%s423 + $0x4] sm:$0xf]
        %v507 = vld [vmem:[%s423 + $0x8] sm:$0xf]
        %v508 = vld [vmem:[%s423 + $0xc] sm:$0xf]
        %v509 = vld [vmem:[%s423 + $0x10] sm:$0xf]
        %v510 = vld [vmem:[%s423 + $0x14] sm:$0xf]
        %v511 = vld [vmem:[%s423 + $0x18] sm:$0xf]
        %v512 = vld [vmem:[%s423 + $0x1c] sm:$0xf]
        %v513 = vld [vmem:[%s423 + $0x20] sm:$0x1]
        %v514 = vld [vmem:[%s348] sm:$0xff]
        %v515 = vld [vmem:[%s348 + $0x8] sm:$0xff]
        %v516 = vld [vmem:[%s348 + $0x10] sm:$0xff]
        %v517 = vld [vmem:[%s348 + $0x18] sm:$0xff]
        %v518 = vld [vmem:[%s348 + $0x20] sm:$0xff]
        %v519 = vld [vmem:[%s348 + $0x28] sm:$0xff]
        %v520 = vld [vmem:[%s348 + $0x30] sm:$0xff]
        %v521 = vld [vmem:[%s348 + $0x38] sm:$0xff]
        %v522 = vld [vmem:[%s348 + $0x40] sm:$0xff]
        %v523 = vld [vmem:[%s348 + $0x48] sm:$0xff]
        %v524 = vld [vmem:[%s348 + $0x50] sm:$0xff]
        %v525 = vld [vmem:[%s348 + $0x58] sm:$0xff]
        %v526 = vld [vmem:[%s348 + $0x60] sm:$0xff]
        %v527 = vld [vmem:[%s348 + $0x68] sm:$0xff]
        %v528 = vld [vmem:[%s348 + $0x70] sm:$0xff]
        %v529 = vld [vmem:[%s348 + $0x78] sm:$0xff]
        %v594 = vunpack.c.l.b16 %v437
        %v595 = vunpack.c.l.b16 %v438
        %v596 = vunpack.c.l.b16 %v439
        %v597 = vunpack.c.l.b16 %v440
        %v598 = vunpack.c.l.b16 %v441
        %v599 = vunpack.c.l.b16 %v442
        %v600 = vunpack.c.l.b16 %v443
        %v601 = vunpack.c.l.b16 %v444
        %v602 = vunpack.c.l.b16 %v445
        %v603 = vunpack.c.l.b16 %v446
        %v604 = vunpack.c.l.b16 %v447
        %v605 = vunpack.c.l.b16 %v448
        %v606 = vunpack.c.l.b16 %v449
        %v607 = vunpack.c.l.b16 %v450
        %v608 = vunpack.c.l.b16 %v451
        %v609 = vunpack.c.l.b16 %v452
        %v610 = vunpack.c.l.b16 %v453
        %v611 = vunpack.c.l.b16 %v454
        %v612 = vunpack.c.l.b16 %v455
        %v613 = vunpack.c.l.b16 %v456
        %v614 = vunpack.c.l.b16 %v457
        %v615 = vunpack.c.l.b16 %v458
        %v616 = vunpack.c.l.b16 %v459
        %v617 = vunpack.c.l.b16 %v460
        %v618 = vunpack.c.l.b16 %v461
        %v619 = vunpack.c.l.b16 %v462
        %v620 = vunpack.c.l.b16 %v463
        %v621 = vunpack.c.l.b16 %v464
        %v622 = vunpack.c.l.b16 %v465
        %v623 = vunpack.c.l.b16 %v466
        %v624 = vunpack.c.l.b16 %v467
        %v625 = vunpack.c.l.b16 %v468
        %v626 = vunpack.c.l.b16 %v469
        %v627 = vunpack.c.l.b16 %v470
        %v628 = vunpack.c.l.b16 %v471
        %v629 = vunpack.c.l.b16 %v472
        %v630 = vunpack.c.l.b16 %v473
        %v631 = vunpack.c.l.b16 %v474
        %v632 = vunpack.c.l.b16 %v475
        %v633 = vunpack.c.l.b16 %v476
        %v634 = vunpack.c.l.b16 %v477
        %v635 = vunpack.c.l.b16 %v478
        %v636 = vunpack.c.l.b16 %v479
        %v637 = vunpack.c.l.b16 %v480
        %v638 = vunpack.c.l.b16 %v481
        %v639 = vunpack.c.l.b16 %v482
        %v640 = vunpack.c.l.b16 %v483
        %v641 = vunpack.c.l.b16 %v484
        %v642 = vunpack.c.l.b16 %v485
        %v643 = vunpack.c.l.b16 %v486
        %v644 = vunpack.c.l.b16 %v487
        %v645 = vunpack.c.l.b16 %v488
        %v646 = vunpack.c.l.b16 %v489
        %v647 = vunpack.c.l.b16 %v490
        %v648 = vunpack.c.l.b16 %v491
        %v649 = vunpack.c.l.b16 %v492
        %v650 = vunpack.c.l.b16 %v493
        %v651 = vunpack.c.l.b16 %v494
        %v652 = vunpack.c.l.b16 %v495
        %v653 = vunpack.c.l.b16 %v496
        %v654 = vunpack.c.l.b16 %v497
        %v655 = vunpack.c.l.b16 %v498
        %v656 = vunpack.c.l.b16 %v499
        %v657 = vunpack.c.l.b16 %v500
        %v658 = vpack.c.b16 %v595, %v594
        %v659 = vpack.c.b16 %v597, %v596
        %v660 = vpack.c.b16 %v599, %v598
        %v661 = vpack.c.b16 %v601, %v600
        %v662 = vpack.c.b16 %v603, %v602
        %v663 = vpack.c.b16 %v605, %v604
        %v664 = vpack.c.b16 %v607, %v606
        %v665 = vpack.c.b16 %v609, %v608
        %v666 = vpack.c.b16 %v611, %v610
        %v667 = vpack.c.b16 %v613, %v612
        %v668 = vpack.c.b16 %v615, %v614
        %v669 = vpack.c.b16 %v617, %v616
        %v670 = vpack.c.b16 %v619, %v618
        %v671 = vpack.c.b16 %v621, %v620
        %v672 = vpack.c.b16 %v623, %v622
        %v673 = vpack.c.b16 %v625, %v624
        %v674 = vpack.c.b16 %v627, %v626
        %v675 = vpack.c.b16 %v629, %v628
        %v676 = vpack.c.b16 %v631, %v630
        %v677 = vpack.c.b16 %v633, %v632
        %v678 = vpack.c.b16 %v635, %v634
        %v679 = vpack.c.b16 %v637, %v636
        %v680 = vpack.c.b16 %v639, %v638
        %v681 = vpack.c.b16 %v641, %v640
        %v682 = vpack.c.b16 %v643, %v642
        %v683 = vpack.c.b16 %v645, %v644
        %v684 = vpack.c.b16 %v647, %v646
        %v685 = vpack.c.b16 %v649, %v648
        %v686 = vpack.c.b16 %v651, %v650
        %v687 = vpack.c.b16 %v653, %v652
        %v688 = vpack.c.b16 %v655, %v654
        %v689 = vpack.c.b16 %v657, %v656
        %v694 = vunpack.c.l.b16 %v501
        %v695 = vunpack.c.l.b16 %v502
        %v696 = vunpack.c.l.b16 %v503
        %v697 = vunpack.c.l.b16 %v504
        %v698 = vpack.c.b16 %v695, %v694
        %v699 = vpack.c.b16 %v697, %v696
        %vm702 = vcmask 261120
        %v704 = vsel %vm702, %v658, 0
        %v707 = vsel %vm702, %v659, 0
        %v710 = vsel %vm702, %v660, 0
        %v713 = vsel %vm702, %v661, 0
        %v716 = vsel %vm702, %v662, 0
        %v719 = vsel %vm702, %v663, 0
        %v722 = vsel %vm702, %v664, 0
        %v725 = vsel %vm702, %v665, 0
        %v728 = vsel %vm702, %v666, 0
        %v731 = vsel %vm702, %v667, 0
        %v734 = vsel %vm702, %v668, 0
        %v737 = vsel %vm702, %v669, 0
        %v740 = vsel %vm702, %v670, 0
        %v743 = vsel %vm702, %v671, 0
        %v746 = vsel %vm702, %v672, 0
        %v749 = vsel %vm702, %v673, 0
        %v752 = vsel %vm702, %v674, 0
        %v755 = vsel %vm702, %v675, 0
        %v758 = vsel %vm702, %v676, 0
        %v761 = vsel %vm702, %v677, 0
        %v764 = vsel %vm702, %v678, 0
        %v767 = vsel %vm702, %v679, 0
        %v770 = vsel %vm702, %v680, 0
        %v773 = vsel %vm702, %v681, 0
        %v776 = vsel %vm702, %v682, 0
        %v779 = vsel %vm702, %v683, 0
        %v782 = vsel %vm702, %v684, 0
        %v785 = vsel %vm702, %v685, 0
        %v788 = vsel %vm702, %v686, 0
        %v791 = vsel %vm702, %v687, 0
        %v794 = vsel %vm702, %v688, 0
        %v797 = vsel %vm702, %v689, 0
        %799 = vmatprep.subr.bf16.mxu0 0
        %800 = vmatpush1.bf16.msra.mxu0 %v698
        %801 = vmatprep.subr.bf16.mxu0 0
        %802 = vmatpush1.bf16.msra.mxu0 %v699
        %803 = vmatprep.subr.bf16.mxu0 0
        %804 = vmatpush1.bf16.msra.mxu0 0
        %805 = vmatprep.subr.bf16.mxu0 0
        %806 = vmatpush1.bf16.msra.mxu0 0
        %807 = vmatprep.subr.bf16.mxu0 0
        %808 = vmatpush1.bf16.msra.mxu0 0
        %809 = vmatprep.subr.bf16.mxu0 0
        %810 = vmatpush1.bf16.msra.mxu0 0
        %811 = vmatprep.subr.bf16.mxu0 0
        %812 = vmatpush1.bf16.msra.mxu0 0
        %813 = vmatprep.subr.bf16.mxu0 0
        %814 = vmatpush1.bf16.msra.mxu0 0
        %815 = vmatprep.subr.bf16.mxu0 0
        %816 = vmatpush1.bf16.msra.mxu0 0
        %817 = vmatprep.subr.bf16.mxu0 0
        %818 = vmatpush1.bf16.msra.mxu0 0
        %819 = vmatprep.subr.bf16.mxu0 0
        %820 = vmatpush1.bf16.msra.mxu0 0
        %821 = vmatprep.subr.bf16.mxu0 0
        %822 = vmatpush1.bf16.msra.mxu0 0
        %823 = vmatprep.subr.bf16.mxu0 0
        %824 = vmatpush1.bf16.msra.mxu0 0
        %825 = vmatprep.subr.bf16.mxu0 0
        %826 = vmatpush1.bf16.msra.mxu0 0
        %827 = vmatprep.subr.bf16.mxu0 0
        %828 = vmatpush1.bf16.msra.mxu0 0
        %829 = vmatprep.subr.bf16.mxu0 0
        %830 = vmatpush1.bf16.msra.mxu0 0
        %831 = vmatprep.mubr.bf16.mxu0 0
        %832 = vmatmul.mubr.bf16.gmra.mrb[0].mxu0 %v704
        %v833 = vpop.f32.mrb[0].mxu0
        %v834 = vadd.f32 0.0, %v833
        %v835 = vpop.f32.mrb[0].mxu0
        %v836 = vpop.f32.mrb[0].mxu0
        %v837 = vadd.f32 0.0, %v836
        %v838 = vpop.f32.mrb[0].mxu0
        %839 = vmatprep.mubr.bf16.mxu0 0
        %840 = vmatmul.mubr.bf16.gmra.mrb[0].mxu0 %v707
        %v841 = vpop.f32.mrb[0].mxu0
        %v842 = vadd.f32 0.0, %v841
        %v843 = vpop.f32.mrb[0].mxu0
        %v844 = vpop.f32.mrb[0].mxu0
        %v845 = vadd.f32 0.0, %v844
        %v846 = vpop.f32.mrb[0].mxu0
        %847 = vmatprep.mubr.bf16.mxu0 0
        %848 = vmatmul.mubr.bf16.gmra.mrb[0].mxu0 %v710
        %v849 = vpop.f32.mrb[0].mxu0
        %v850 = vadd.f32 0.0, %v849
        %v851 = vpop.f32.mrb[0].mxu0
        %v852 = vpop.f32.mrb[0].mxu0
        %v853 = vadd.f32 0.0, %v852
        %v854 = vpop.f32.mrb[0].mxu0
        %855 = vmatprep.mubr.bf16.mxu0 0
        %856 = vmatmul.mubr.bf16.gmra.mrb[0].mxu0 %v713
        %v857 = vpop.f32.mrb[0].mxu0
        %v858 = vadd.f32 0.0, %v857
        %v859 = vpop.f32.mrb[0].mxu0
        %v860 = vpop.f32.mrb[0].mxu0
        %v861 = vadd.f32 0.0, %v860
        %v862 = vpop.f32.mrb[0].mxu0
        %863 = vmatprep.mubr.bf16.mxu0 0
        %864 = vmatmul.mubr.bf16.gmra.mrb[0].mxu0 %v716
        %v865 = vpop.f32.mrb[0].mxu0
        %v866 = vadd.f32 0.0, %v865
        %v867 = vpop.f32.mrb[0].mxu0
        %v868 = vpop.f32.mrb[0].mxu0
        %v869 = vadd.f32 0.0, %v868
        %v870 = vpop.f32.mrb[0].mxu0
        %871 = vmatprep.mubr.bf16.mxu0 0
        %872 = vmatmul.mubr.bf16.gmra.mrb[0].mxu0 %v719
        %v873 = vpop.f32.mrb[0].mxu0
        %v874 = vadd.f32 0.0, %v873
        %v875 = vpop.f32.mrb[0].mxu0
        %v876 = vpop.f32.mrb[0].mxu0
        %v877 = vadd.f32 0.0, %v876
        %v878 = vpop.f32.mrb[0].mxu0
        %879 = vmatprep.mubr.bf16.mxu0 0
        %880 = vmatmul.mubr.bf16.gmra.mrb[0].mxu0 %v722
        %v881 = vpop.f32.mrb[0].mxu0
        %v882 = vadd.f32 0.0, %v881
        %v883 = vpop.f32.mrb[0].mxu0
        %v884 = vpop.f32.mrb[0].mxu0
        %v885 = vadd.f32 0.0, %v884
        %v886 = vpop.f32.mrb[0].mxu0
        %887 = vmatprep.mubr.bf16.mxu0 0
        %888 = vmatmul.mubr.bf16.gmra.mrb[0].mxu0 %v725
        %v889 = vpop.f32.mrb[0].mxu0
        %v890 = vadd.f32 0.0, %v889
        %v891 = vpop.f32.mrb[0].mxu0
        %v892 = vpop.f32.mrb[0].mxu0
        %v893 = vadd.f32 0.0, %v892
        %v894 = vpop.f32.mrb[0].mxu0
        %895 = vmatprep.mubr.bf16.mxu0 0
        %896 = vmatmul.mubr.bf16.gmra.mrb[0].mxu0 %v728
        %v897 = vpop.f32.mrb[0].mxu0
        %v898 = vadd.f32 0.0, %v897
        %v899 = vpop.f32.mrb[0].mxu0
        %v900 = vpop.f32.mrb[0].mxu0
        %v901 = vadd.f32 0.0, %v900
        %v902 = vpop.f32.mrb[0].mxu0
        %903 = vmatprep.mubr.bf16.mxu0 0
        %904 = vmatmul.mubr.bf16.gmra.mrb[0].mxu0 %v731
        %v905 = vpop.f32.mrb[0].mxu0
        %v906 = vadd.f32 0.0, %v905
        %v907 = vpop.f32.mrb[0].mxu0
        %v908 = vpop.f32.mrb[0].mxu0
        %v909 = vadd.f32 0.0, %v908
        %v910 = vpop.f32.mrb[0].mxu0
        %911 = vmatprep.mubr.bf16.mxu0 0
        %912 = vmatmul.mubr.bf16.gmra.mrb[0].mxu0 %v734
        %v913 = vpop.f32.mrb[0].mxu0
        %v914 = vadd.f32 0.0, %v913
        %v915 = vpop.f32.mrb[0].mxu0
        %v916 = vpop.f32.mrb[0].mxu0
        %v917 = vadd.f32 0.0, %v916
        %v918 = vpop.f32.mrb[0].mxu0
        %919 = vmatprep.mubr.bf16.mxu0 0
        %920 = vmatmul.mubr.bf16.gmra.mrb[0].mxu0 %v737
        %v921 = vpop.f32.mrb[0].mxu0
        %v922 = vadd.f32 0.0, %v921
        %v923 = vpop.f32.mrb[0].mxu0
        %v924 = vpop.f32.mrb[0].mxu0
        %v925 = vadd.f32 0.0, %v924
        %v926 = vpop.f32.mrb[0].mxu0
        %927 = vmatprep.mubr.bf16.mxu0 0
        %928 = vmatmul.mubr.bf16.gmra.mrb[0].mxu0 %v740
        %v929 = vpop.f32.mrb[0].mxu0
        %v930 = vadd.f32 0.0, %v929
        %v931 = vpop.f32.mrb[0].mxu0
        %v932 = vpop.f32.mrb[0].mxu0
        %v933 = vadd.f32 0.0, %v932
        %v934 = vpop.f32.mrb[0].mxu0
        %935 = vmatprep.mubr.bf16.mxu0 0
        %936 = vmatmul.mubr.bf16.gmra.mrb[0].mxu0 %v743
        %v937 = vpop.f32.mrb[0].mxu0
        %v938 = vadd.f32 0.0, %v937
        %v939 = vpop.f32.mrb[0].mxu0
        %v940 = vpop.f32.mrb[0].mxu0
        %v941 = vadd.f32 0.0, %v940
        %v942 = vpop.f32.mrb[0].mxu0
        %943 = vmatprep.mubr.bf16.mxu0 0
        %944 = vmatmul.mubr.bf16.gmra.mrb[0].mxu0 %v746
        %v945 = vpop.f32.mrb[0].mxu0
        %v946 = vadd.f32 0.0, %v945
        %v947 = vpop.f32.mrb[0].mxu0
        %v948 = vpop.f32.mrb[0].mxu0
        %v949 = vadd.f32 0.0, %v948
        %v950 = vpop.f32.mrb[0].mxu0
        %951 = vmatprep.mubr.bf16.mxu0 0
        %952 = vmatmul.mubr.bf16.gmra.mrb[0].mxu0 %v749
        %v953 = vpop.f32.mrb[0].mxu0
        %v954 = vadd.f32 0.0, %v953
        %v955 = vpop.f32.mrb[0].mxu0
        %v956 = vpop.f32.mrb[0].mxu0
        %v957 = vadd.f32 0.0, %v956
        %v958 = vpop.f32.mrb[0].mxu0
        %959 = vmatprep.mubr.bf16.mxu0 0
        %960 = vmatmul.mubr.bf16.gmra.mrb[0].mxu0 %v752
        %v961 = vpop.f32.mrb[0].mxu0
        %v962 = vadd.f32 0.0, %v961
        %v963 = vpop.f32.mrb[0].mxu0
        %v964 = vpop.f32.mrb[0].mxu0
        %v965 = vadd.f32 0.0, %v964
        %v966 = vpop.f32.mrb[0].mxu0
        %967 = vmatprep.mubr.bf16.mxu0 0
        %968 = vmatmul.mubr.bf16.gmra.mrb[0].mxu0 %v755
        %v969 = vpop.f32.mrb[0].mxu0
        %v970 = vadd.f32 0.0, %v969
        %v971 = vpop.f32.mrb[0].mxu0
        %v972 = vpop.f32.mrb[0].mxu0
        %v973 = vadd.f32 0.0, %v972
        %v974 = vpop.f32.mrb[0].mxu0
        %975 = vmatprep.mubr.bf16.mxu0 0
        %976 = vmatmul.mubr.bf16.gmra.mrb[0].mxu0 %v758
        %v977 = vpop.f32.mrb[0].mxu0
        %v978 = vadd.f32 0.0, %v977
        %v979 = vpop.f32.mrb[0].mxu0
        %v980 = vpop.f32.mrb[0].mxu0
        %v981 = vadd.f32 0.0, %v980
        %v982 = vpop.f32.mrb[0].mxu0
        %983 = vmatprep.mubr.bf16.mxu0 0
        %984 = vmatmul.mubr.bf16.gmra.mrb[0].mxu0 %v761
        %v985 = vpop.f32.mrb[0].mxu0
        %v986 = vadd.f32 0.0, %v985
        %v987 = vpop.f32.mrb[0].mxu0
        %v988 = vpop.f32.mrb[0].mxu0
        %v989 = vadd.f32 0.0, %v988
        %v990 = vpop.f32.mrb[0].mxu0
        %991 = vmatprep.mubr.bf16.mxu0 0
        %992 = vmatmul.mubr.bf16.gmra.mrb[0].mxu0 %v764
        %v993 = vpop.f32.mrb[0].mxu0
        %v994 = vadd.f32 0.0, %v993
        %v995 = vpop.f32.mrb[0].mxu0
        %v996 = vpop.f32.mrb[0].mxu0
        %v997 = vadd.f32 0.0, %v996
        %v998 = vpop.f32.mrb[0].mxu0
        %999 = vmatprep.mubr.bf16.mxu0 0
        %1000 = vmatmul.mubr.bf16.gmra.mrb[0].mxu0 %v767
        %v1001 = vpop.f32.mrb[0].mxu0
        %v1002 = vadd.f32 0.0, %v1001
        %v1003 = vpop.f32.mrb[0].mxu0
        %v1004 = vpop.f32.mrb[0].mxu0
        %v1005 = vadd.f32 0.0, %v1004
        %v1006 = vpop.f32.mrb[0].mxu0
        %1007 = vmatprep.mubr.bf16.mxu0 0
        %1008 = vmatmul.mubr.bf16.gmra.mrb[0].mxu0 %v770
        %v1009 = vpop.f32.mrb[0].mxu0
        %v1010 = vadd.f32 0.0, %v1009
        %v1011 = vpop.f32.mrb[0].mxu0
        %v1012 = vpop.f32.mrb[0].mxu0
        %v1013 = vadd.f32 0.0, %v1012
        %v1014 = vpop.f32.mrb[0].mxu0
        %1015 = vmatprep.mubr.bf16.mxu0 0
        %1016 = vmatmul.mubr.bf16.gmra.mrb[0].mxu0 %v773
        %v1017 = vpop.f32.mrb[0].mxu0
        %v1018 = vadd.f32 0.0, %v1017
        %v1019 = vpop.f32.mrb[0].mxu0
        %v1020 = vpop.f32.mrb[0].mxu0
        %v1021 = vadd.f32 0.0, %v1020
        %v1022 = vpop.f32.mrb[0].mxu0
        %1023 = vmatprep.mubr.bf16.mxu0 0
        %1024 = vmatmul.mubr.bf16.gmra.mrb[0].mxu0 %v776
        %v1025 = vpop.f32.mrb[0].mxu0
        %v1026 = vadd.f32 0.0, %v1025
        %v1027 = vpop.f32.mrb[0].mxu0
        %v1028 = vpop.f32.mrb[0].mxu0
        %v1029 = vadd.f32 0.0, %v1028
        %v1030 = vpop.f32.mrb[0].mxu0
        %1031 = vmatprep.mubr.bf16.mxu0 0
        %1032 = vmatmul.mubr.bf16.gmra.mrb[0].mxu0 %v779
        %v1033 = vpop.f32.mrb[0].mxu0
        %v1034 = vadd.f32 0.0, %v1033
        %v1035 = vpop.f32.mrb[0].mxu0
        %v1036 = vpop.f32.mrb[0].mxu0
        %v1037 = vadd.f32 0.0, %v1036
        %v1038 = vpop.f32.mrb[0].mxu0
        %1039 = vmatprep.mubr.bf16.mxu0 0
        %1040 = vmatmul.mubr.bf16.gmra.mrb[0].mxu0 %v782
        %v1041 = vpop.f32.mrb[0].mxu0
        %v1042 = vadd.f32 0.0, %v1041
        %v1043 = vpop.f32.mrb[0].mxu0
        %v1044 = vpop.f32.mrb[0].mxu0
        %v1045 = vadd.f32 0.0, %v1044
        %v1046 = vpop.f32.mrb[0].mxu0
        %1047 = vmatprep.mubr.bf16.mxu0 0
        %1048 = vmatmul.mubr.bf16.gmra.mrb[0].mxu0 %v785
        %v1049 = vpop.f32.mrb[0].mxu0
        %v1050 = vadd.f32 0.0, %v1049
        %v1051 = vpop.f32.mrb[0].mxu0
        %v1052 = vpop.f32.mrb[0].mxu0
        %v1053 = vadd.f32 0.0, %v1052
        %v1054 = vpop.f32.mrb[0].mxu0
        %1055 = vmatprep.mubr.bf16.mxu0 0
        %1056 = vmatmul.mubr.bf16.gmra.mrb[0].mxu0 %v788
        %v1057 = vpop.f32.mrb[0].mxu0
        %v1058 = vadd.f32 0.0, %v1057
        %v1059 = vpop.f32.mrb[0].mxu0
        %v1060 = vpop.f32.mrb[0].mxu0
        %v1061 = vadd.f32 0.0, %v1060
        %v1062 = vpop.f32.mrb[0].mxu0
        %1063 = vmatprep.mubr.bf16.mxu0 0
        %1064 = vmatmul.mubr.bf16.gmra.mrb[0].mxu0 %v791
        %v1065 = vpop.f32.mrb[0].mxu0
        %v1066 = vadd.f32 0.0, %v1065
        %v1067 = vpop.f32.mrb[0].mxu0
        %v1068 = vpop.f32.mrb[0].mxu0
        %v1069 = vadd.f32 0.0, %v1068
        %v1070 = vpop.f32.mrb[0].mxu0
        %1071 = vmatprep.mubr.bf16.mxu0 0
        %1072 = vmatmul.mubr.bf16.gmra.mrb[0].mxu0 %v794
        %v1073 = vpop.f32.mrb[0].mxu0
        %v1074 = vadd.f32 0.0, %v1073
        %v1075 = vpop.f32.mrb[0].mxu0
        %v1076 = vpop.f32.mrb[0].mxu0
        %v1077 = vadd.f32 0.0, %v1076
        %v1078 = vpop.f32.mrb[0].mxu0
        %1079 = vmatprep.mubr.bf16.mxu0 0
        %1080 = vmatmul.mubr.bf16.gmra.mrb[0].mxu0 %v797
        %v1081 = vpop.f32.mrb[0].mxu0
        %v1082 = vadd.f32 0.0, %v1081
        %v1083 = vpop.f32.mrb[0].mxu0
        %v1084 = vpop.f32.mrb[0].mxu0
        %v1085 = vadd.f32 0.0, %v1084
        %v1086 = vpop.f32.mrb[0].mxu0
        %1087 = vdwg.mxu0
        %1088 = vmax.xlane.f32.xlu0 %v834
        %v1089 = vpop.xlane.xlu0 %1088
        %1090 = vmax.xlane.f32.xlu0 %v837
        %v1091 = vpop.xlane.xlu0 %1090
        %1092 = vmax.xlane.f32.xlu0 %v842
        %v1093 = vpop.xlane.xlu0 %1092
        %1094 = vmax.xlane.f32.xlu0 %v845
        %v1095 = vpop.xlane.xlu0 %1094
        %1096 = vmax.xlane.f32.xlu0 %v850
        %v1097 = vpop.xlane.xlu0 %1096
        %1098 = vmax.xlane.f32.xlu0 %v853
        %v1099 = vpop.xlane.xlu0 %1098
        %1100 = vmax.xlane.f32.xlu0 %v858
        %v1101 = vpop.xlane.xlu0 %1100
        %1102 = vmax.xlane.f32.xlu0 %v861
        %v1103 = vpop.xlane.xlu0 %1102
        %1104 = vmax.xlane.f32.xlu0 %v866
        %v1105 = vpop.xlane.xlu0 %1104
        %1106 = vmax.xlane.f32.xlu0 %v869
        %v1107 = vpop.xlane.xlu0 %1106
        %1108 = vmax.xlane.f32.xlu0 %v874
        %v1109 = vpop.xlane.xlu0 %1108
        %1110 = vmax.xlane.f32.xlu0 %v877
        %v1111 = vpop.xlane.xlu0 %1110
        %1112 = vmax.xlane.f32.xlu0 %v882
        %v1113 = vpop.xlane.xlu0 %1112
        %1114 = vmax.xlane.f32.xlu0 %v885
        %v1115 = vpop.xlane.xlu0 %1114
        %1116 = vmax.xlane.f32.xlu0 %v890
        %v1117 = vpop.xlane.xlu0 %1116
        %1118 = vmax.xlane.f32.xlu0 %v893
        %v1119 = vpop.xlane.xlu0 %1118
        %1120 = vmax.xlane.f32.xlu0 %v898
        %v1121 = vpop.xlane.xlu0 %1120
        %1122 = vmax.xlane.f32.xlu0 %v901
        %v1123 = vpop.xlane.xlu0 %1122
        %1124 = vmax.xlane.f32.xlu0 %v906
        %v1125 = vpop.xlane.xlu0 %1124
        %1126 = vmax.xlane.f32.xlu0 %v909
        %v1127 = vpop.xlane.xlu0 %1126
        %1128 = vmax.xlane.f32.xlu0 %v914
        %v1129 = vpop.xlane.xlu0 %1128
        %1130 = vmax.xlane.f32.xlu0 %v917
        %v1131 = vpop.xlane.xlu0 %1130
        %1132 = vmax.xlane.f32.xlu0 %v922
        %v1133 = vpop.xlane.xlu0 %1132
        %1134 = vmax.xlane.f32.xlu0 %v925
        %v1135 = vpop.xlane.xlu0 %1134
        %1136 = vmax.xlane.f32.xlu0 %v930
        %v1137 = vpop.xlane.xlu0 %1136
        %1138 = vmax.xlane.f32.xlu0 %v933
        %v1139 = vpop.xlane.xlu0 %1138
        %1140 = vmax.xlane.f32.xlu0 %v938
        %v1141 = vpop.xlane.xlu0 %1140
        %1142 = vmax.xlane.f32.xlu0 %v941
        %v1143 = vpop.xlane.xlu0 %1142
        %1144 = vmax.xlane.f32.xlu0 %v946
        %v1145 = vpop.xlane.xlu0 %1144
        %1146 = vmax.xlane.f32.xlu0 %v949
        %v1147 = vpop.xlane.xlu0 %1146
        %1148 = vmax.xlane.f32.xlu0 %v954
        %v1149 = vpop.xlane.xlu0 %1148
        %1150 = vmax.xlane.f32.xlu0 %v957
        %v1151 = vpop.xlane.xlu0 %1150
        %1152 = vmax.xlane.f32.xlu0 %v962
        %v1153 = vpop.xlane.xlu0 %1152
        %1154 = vmax.xlane.f32.xlu0 %v965
        %v1155 = vpop.xlane.xlu0 %1154
        %1156 = vmax.xlane.f32.xlu0 %v970
        %v1157 = vpop.xlane.xlu0 %1156
        %1158 = vmax.xlane.f32.xlu0 %v973
        %v1159 = vpop.xlane.xlu0 %1158
        %1160 = vmax.xlane.f32.xlu0 %v978
        %v1161 = vpop.xlane.xlu0 %1160
        %1162 = vmax.xlane.f32.xlu0 %v981
        %v1163 = vpop.xlane.xlu0 %1162
        %1164 = vmax.xlane.f32.xlu0 %v986
        %v1165 = vpop.xlane.xlu0 %1164
        %1166 = vmax.xlane.f32.xlu0 %v989
        %v1167 = vpop.xlane.xlu0 %1166
        %1168 = vmax.xlane.f32.xlu0 %v994
        %v1169 = vpop.xlane.xlu0 %1168
        %1170 = vmax.xlane.f32.xlu0 %v997
        %v1171 = vpop.xlane.xlu0 %1170
        %1172 = vmax.xlane.f32.xlu0 %v1002
        %v1173 = vpop.xlane.xlu0 %1172
        %1174 = vmax.xlane.f32.xlu0 %v1005
        %v1175 = vpop.xlane.xlu0 %1174
        %1176 = vmax.xlane.f32.xlu0 %v1010
        %v1177 = vpop.xlane.xlu0 %1176
        %1178 = vmax.xlane.f32.xlu0 %v1013
        %v1179 = vpop.xlane.xlu0 %1178
        %1180 = vmax.xlane.f32.xlu0 %v1018
        %v1181 = vpop.xlane.xlu0 %1180
        %1182 = vmax.xlane.f32.xlu0 %v1021
        %v1183 = vpop.xlane.xlu0 %1182
        %1184 = vmax.xlane.f32.xlu0 %v1026
        %v1185 = vpop.xlane.xlu0 %1184
        %1186 = vmax.xlane.f32.xlu0 %v1029
        %v1187 = vpop.xlane.xlu0 %1186
        %1188 = vmax.xlane.f32.xlu0 %v1034
        %v1189 = vpop.xlane.xlu0 %1188
        %1190 = vmax.xlane.f32.xlu0 %v1037
        %v1191 = vpop.xlane.xlu0 %1190
        %1192 = vmax.xlane.f32.xlu0 %v1042
        %v1193 = vpop.xlane.xlu0 %1192
        %1194 = vmax.xlane.f32.xlu0 %v1045
        %v1195 = vpop.xlane.xlu0 %1194
        %1196 = vmax.xlane.f32.xlu0 %v1050
        %v1197 = vpop.xlane.xlu0 %1196
        %1198 = vmax.xlane.f32.xlu0 %v1053
        %v1199 = vpop.xlane.xlu0 %1198
        %1200 = vmax.xlane.f32.xlu0 %v1058
        %v1201 = vpop.xlane.xlu0 %1200
        %1202 = vmax.xlane.f32.xlu0 %v1061
        %v1203 = vpop.xlane.xlu0 %1202
        %1204 = vmax.xlane.f32.xlu0 %v1066
        %v1205 = vpop.xlane.xlu0 %1204
        %1206 = vmax.xlane.f32.xlu0 %v1069
        %v1207 = vpop.xlane.xlu0 %1206
        %1208 = vmax.xlane.f32.xlu0 %v1074
        %v1209 = vpop.xlane.xlu0 %1208
        %1210 = vmax.xlane.f32.xlu0 %v1077
        %v1211 = vpop.xlane.xlu0 %1210
        %1212 = vmax.xlane.f32.xlu0 %v1082
        %v1213 = vpop.xlane.xlu0 %1212
        %1214 = vmax.xlane.f32.xlu0 %v1085
        %v1215 = vpop.xlane.xlu0 %1214
        %v1216 = vsub.f32 %v834, %v1089
        %v1217 = vsub.f32 %v837, %v1091
        %v1218 = vsub.f32 %v842, %v1093
        %v1219 = vsub.f32 %v845, %v1095
        %v1220 = vsub.f32 %v850, %v1097
        %v1221 = vsub.f32 %v853, %v1099
        %v1222 = vsub.f32 %v858, %v1101
        %v1223 = vsub.f32 %v861, %v1103
        %v1224 = vsub.f32 %v866, %v1105
        %v1225 = vsub.f32 %v869, %v1107
        %v1226 = vsub.f32 %v874, %v1109
        %v1227 = vsub.f32 %v877, %v1111
        %v1228 = vsub.f32 %v882, %v1113
        %v1229 = vsub.f32 %v885, %v1115
        %v1230 = vsub.f32 %v890, %v1117
        %v1231 = vsub.f32 %v893, %v1119
        %v1232 = vsub.f32 %v898, %v1121
        %v1233 = vsub.f32 %v901, %v1123
        %v1234 = vsub.f32 %v906, %v1125
        %v1235 = vsub.f32 %v909, %v1127
        %v1236 = vsub.f32 %v914, %v1129
        %v1237 = vsub.f32 %v917, %v1131
        %v1238 = vsub.f32 %v922, %v1133
        %v1239 = vsub.f32 %v925, %v1135
        %v1240 = vsub.f32 %v930, %v1137
        %v1241 = vsub.f32 %v933, %v1139
        %v1242 = vsub.f32 %v938, %v1141
        %v1243 = vsub.f32 %v941, %v1143
        %v1244 = vsub.f32 %v946, %v1145
        %v1245 = vsub.f32 %v949, %v1147
        %v1246 = vsub.f32 %v954, %v1149
        %v1247 = vsub.f32 %v957, %v1151
        %v1248 = vsub.f32 %v962, %v1153
        %v1249 = vsub.f32 %v965, %v1155
        %v1250 = vsub.f32 %v970, %v1157
        %v1251 = vsub.f32 %v973, %v1159
        %v1252 = vsub.f32 %v978, %v1161
        %v1253 = vsub.f32 %v981, %v1163
        %v1254 = vsub.f32 %v986, %v1165
        %v1255 = vsub.f32 %v989, %v1167
        %v1256 = vsub.f32 %v994, %v1169
        %v1257 = vsub.f32 %v997, %v1171
        %v1258 = vsub.f32 %v1002, %v1173
        %v1259 = vsub.f32 %v1005, %v1175
        %v1260 = vsub.f32 %v1010, %v1177
        %v1261 = vsub.f32 %v1013, %v1179
        %v1262 = vsub.f32 %v1018, %v1181
        %v1263 = vsub.f32 %v1021, %v1183
        %v1264 = vsub.f32 %v1026, %v1185
        %v1265 = vsub.f32 %v1029, %v1187
        %v1266 = vsub.f32 %v1034, %v1189
        %v1267 = vsub.f32 %v1037, %v1191
        %v1268 = vsub.f32 %v1042, %v1193
        %v1269 = vsub.f32 %v1045, %v1195
        %v1270 = vsub.f32 %v1050, %v1197
        %v1271 = vsub.f32 %v1053, %v1199
        %v1272 = vsub.f32 %v1058, %v1201
        %v1273 = vsub.f32 %v1061, %v1203
        %v1274 = vsub.f32 %v1066, %v1205
        %v1275 = vsub.f32 %v1069, %v1207
        %v1276 = vsub.f32 %v1074, %v1209
        %v1277 = vsub.f32 %v1077, %v1211
        %v1278 = vsub.f32 %v1082, %v1213
        %v1279 = vsub.f32 %v1085, %v1215
        %v1280 = vmul.f32 %v1216, 1.442695
        %v1281 = vpow.pop %v1280
        %v1282 = vmul.f32 %v1217, 1.442695
        %v1283 = vpow.pop %v1282
        %v1284 = vmul.f32 %v1218, 1.442695
        %v1285 = vpow.pop %v1284
        %v1286 = vmul.f32 %v1219, 1.442695
        %v1287 = vpow.pop %v1286
        %v1288 = vmul.f32 %v1220, 1.442695
        %v1289 = vpow.pop %v1288
        %v1290 = vmul.f32 %v1221, 1.442695
        %v1291 = vpow.pop %v1290
        %v1292 = vmul.f32 %v1222, 1.442695
        %v1293 = vpow.pop %v1292
        %v1294 = vmul.f32 %v1223, 1.442695
        %v1295 = vpow.pop %v1294
        %v1296 = vmul.f32 %v1224, 1.442695
        %v1297 = vpow.pop %v1296
        %v1298 = vmul.f32 %v1225, 1.442695
        %v1299 = vpow.pop %v1298
        %v1300 = vmul.f32 %v1226, 1.442695
        %v1301 = vpow.pop %v1300
        %v1302 = vmul.f32 %v1227, 1.442695
        %v1303 = vpow.pop %v1302
        %v1304 = vmul.f32 %v1228, 1.442695
        %v1305 = vpow.pop %v1304
        %v1306 = vmul.f32 %v1229, 1.442695
        %v1307 = vpow.pop %v1306
        %v1308 = vmul.f32 %v1230, 1.442695
        %v1309 = vpow.pop %v1308
        %v1310 = vmul.f32 %v1231, 1.442695
        %v1311 = vpow.pop %v1310
        %v1312 = vmul.f32 %v1232, 1.442695
        %v1313 = vpow.pop %v1312
        %v1314 = vmul.f32 %v1233, 1.442695
        %v1315 = vpow.pop %v1314
        %v1316 = vmul.f32 %v1234, 1.442695
        %v1317 = vpow.pop %v1316
        %v1318 = vmul.f32 %v1235, 1.442695
        %v1319 = vpow.pop %v1318
        %v1320 = vmul.f32 %v1236, 1.442695
        %v1321 = vpow.pop %v1320
        %v1322 = vmul.f32 %v1237, 1.442695
        %v1323 = vpow.pop %v1322
        %v1324 = vmul.f32 %v1238, 1.442695
        %v1325 = vpow.pop %v1324
        %v1326 = vmul.f32 %v1239, 1.442695
        %v1327 = vpow.pop %v1326
        %v1328 = vmul.f32 %v1240, 1.442695
        %v1329 = vpow.pop %v1328
        %v1330 = vmul.f32 %v1241, 1.442695
        %v1331 = vpow.pop %v1330
        %v1332 = vmul.f32 %v1242, 1.442695
        %v1333 = vpow.pop %v1332
        %v1334 = vmul.f32 %v1243, 1.442695
        %v1335 = vpow.pop %v1334
        %v1336 = vmul.f32 %v1244, 1.442695
        %v1337 = vpow.pop %v1336
        %v1338 = vmul.f32 %v1245, 1.442695
        %v1339 = vpow.pop %v1338
        %v1340 = vmul.f32 %v1246, 1.442695
        %v1341 = vpow.pop %v1340
        %v1342 = vmul.f32 %v1247, 1.442695
        %v1343 = vpow.pop %v1342
        %v1344 = vmul.f32 %v1248, 1.442695
        %v1345 = vpow.pop %v1344
        %v1346 = vmul.f32 %v1249, 1.442695
        %v1347 = vpow.pop %v1346
        %v1348 = vmul.f32 %v1250, 1.442695
        %v1349 = vpow.pop %v1348
        %v1350 = vmul.f32 %v1251, 1.442695
        %v1351 = vpow.pop %v1350
        %v1352 = vmul.f32 %v1252, 1.442695
        %v1353 = vpow.pop %v1352
        %v1354 = vmul.f32 %v1253, 1.442695
        %v1355 = vpow.pop %v1354
        %v1356 = vmul.f32 %v1254, 1.442695
        %v1357 = vpow.pop %v1356
        %v1358 = vmul.f32 %v1255, 1.442695
        %v1359 = vpow.pop %v1358
        %v1360 = vmul.f32 %v1256, 1.442695
        %v1361 = vpow.pop %v1360
        %v1362 = vmul.f32 %v1257, 1.442695
        %v1363 = vpow.pop %v1362
        %v1364 = vmul.f32 %v1258, 1.442695
        %v1365 = vpow.pop %v1364
        %v1366 = vmul.f32 %v1259, 1.442695
        %v1367 = vpow.pop %v1366
        %v1368 = vmul.f32 %v1260, 1.442695
        %v1369 = vpow.pop %v1368
        %v1370 = vmul.f32 %v1261, 1.442695
        %v1371 = vpow.pop %v1370
        %v1372 = vmul.f32 %v1262, 1.442695
        %v1373 = vpow.pop %v1372
        %v1374 = vmul.f32 %v1263, 1.442695
        %v1375 = vpow.pop %v1374
        %v1376 = vmul.f32 %v1264, 1.442695
        %v1377 = vpow.pop %v1376
        %v1378 = vmul.f32 %v1265, 1.442695
        %v1379 = vpow.pop %v1378
        %v1380 = vmul.f32 %v1266, 1.442695
        %v1381 = vpow.pop %v1380
        %v1382 = vmul.f32 %v1267, 1.442695
        %v1383 = vpow.pop %v1382
        %v1384 = vmul.f32 %v1268, 1.442695
        %v1385 = vpow.pop %v1384
        %v1386 = vmul.f32 %v1269, 1.442695
        %v1387 = vpow.pop %v1386
        %v1388 = vmul.f32 %v1270, 1.442695
        %v1389 = vpow.pop %v1388
        %v1390 = vmul.f32 %v1271, 1.442695
        %v1391 = vpow.pop %v1390
        %v1392 = vmul.f32 %v1272, 1.442695
        %v1393 = vpow.pop %v1392
        %v1394 = vmul.f32 %v1273, 1.442695
        %v1395 = vpow.pop %v1394
        %v1396 = vmul.f32 %v1274, 1.442695
        %v1397 = vpow.pop %v1396
        %v1398 = vmul.f32 %v1275, 1.442695
        %v1399 = vpow.pop %v1398
        %v1400 = vmul.f32 %v1276, 1.442695
        %v1401 = vpow.pop %v1400
        %v1402 = vmul.f32 %v1277, 1.442695
        %v1403 = vpow.pop %v1402
        %v1404 = vmul.f32 %v1278, 1.442695
        %v1405 = vpow.pop %v1404
        %v1406 = vmul.f32 %v1279, 1.442695
        %v1407 = vpow.pop %v1406
        %v1408 = vpack.c.bf16 %v1283, %v1281
        %v1409 = vpack.c.bf16 %v1287, %v1285
        %v1410 = vpack.c.bf16 %v1291, %v1289
        %v1411 = vpack.c.bf16 %v1295, %v1293
        %v1412 = vpack.c.bf16 %v1299, %v1297
        %v1413 = vpack.c.bf16 %v1303, %v1301
        %v1414 = vpack.c.bf16 %v1307, %v1305
        %v1415 = vpack.c.bf16 %v1311, %v1309
        %v1416 = vpack.c.bf16 %v1315, %v1313
        %v1417 = vpack.c.bf16 %v1319, %v1317
        %v1418 = vpack.c.bf16 %v1323, %v1321
        %v1419 = vpack.c.bf16 %v1327, %v1325
        %v1420 = vpack.c.bf16 %v1331, %v1329
        %v1421 = vpack.c.bf16 %v1335, %v1333
        %v1422 = vpack.c.bf16 %v1339, %v1337
        %v1423 = vpack.c.bf16 %v1343, %v1341
        %v1424 = vpack.c.bf16 %v1347, %v1345
        %v1425 = vpack.c.bf16 %v1351, %v1349
        %v1426 = vpack.c.bf16 %v1355, %v1353
        %v1427 = vpack.c.bf16 %v1359, %v1357
        %v1428 = vpack.c.bf16 %v1363, %v1361
        %v1429 = vpack.c.bf16 %v1367, %v1365
        %v1430 = vpack.c.bf16 %v1371, %v1369
        %v1431 = vpack.c.bf16 %v1375, %v1373
        %v1432 = vpack.c.bf16 %v1379, %v1377
        %v1433 = vpack.c.bf16 %v1383, %v1381
        %v1434 = vpack.c.bf16 %v1387, %v1385
        %v1435 = vpack.c.bf16 %v1391, %v1389
        %v1436 = vpack.c.bf16 %v1395, %v1393
        %v1437 = vpack.c.bf16 %v1399, %v1397
        %v1438 = vpack.c.bf16 %v1403, %v1401
        %v1439 = vpack.c.bf16 %v1407, %v1405
        %v1449 = vunpack.c.l.b16 %v505
        %v1450 = vunpack.c.l.b16 %v506
        %v1451 = vunpack.c.l.b16 %v507
        %v1452 = vunpack.c.l.b16 %v508
        %v1453 = vunpack.c.l.b16 %v509
        %v1454 = vunpack.c.l.b16 %v510
        %v1455 = vunpack.c.l.b16 %v511
        %v1456 = vunpack.c.l.b16 %v512
        %v1457 = vunpack.c.l.b16 %v513
        %v1458 = vpack.c.b16 %v1450, %v1449
        %v1459 = vpack.c.b16 %v1452, %v1451
        %v1460 = vpack.c.b16 %v1454, %v1453
        %v1461 = vpack.c.b16 %v1456, %v1455
        %v1462 = vpack.c.b16 %v1457, %v1457
        %1468 = vmatprep.subr.bf16.mxu0 0
        %1469 = vmatpush1.bf16.xpose.msra.mxu0 %v1408
        %1470 = vmatprep.subr.bf16.mxu0 0
        %1471 = vmatpush1.bf16.xpose.msra.mxu0 %v1409
        %1472 = vmatprep.subr.bf16.mxu0 0
        %1473 = vmatpush1.bf16.xpose.msra.mxu0 %v1410
        %1474 = vmatprep.subr.bf16.mxu0 0
        %1475 = vmatpush1.bf16.xpose.msra.mxu0 %v1411
        %1476 = vmatprep.subr.bf16.mxu0 0
        %1477 = vmatpush1.bf16.xpose.msra.mxu0 %v1412
        %1478 = vmatprep.subr.bf16.mxu0 0
        %1479 = vmatpush1.bf16.xpose.msra.mxu0 %v1413
        %1480 = vmatprep.subr.bf16.mxu0 0
        %1481 = vmatpush1.bf16.xpose.msra.mxu0 %v1414
        %1482 = vmatprep.subr.bf16.mxu0 0
        %1483 = vmatpush1.bf16.xpose.msra.mxu0 %v1415
        %1484 = vmatprep.subr.bf16.mxu0 0
        %1485 = vmatpush1.bf16.xpose.msra.mxu0 %v1416
        %1486 = vmatprep.subr.bf16.mxu0 0
        %1487 = vmatpush1.bf16.xpose.msra.mxu0 %v1417
        %1488 = vmatprep.subr.bf16.mxu0 0
        %1489 = vmatpush1.bf16.xpose.msra.mxu0 %v1418
        %1490 = vmatprep.subr.bf16.mxu0 0
        %1491 = vmatpush1.bf16.xpose.msra.mxu0 %v1419
        %1492 = vmatprep.subr.bf16.mxu0 0
        %1493 = vmatpush1.bf16.xpose.msra.mxu0 %v1420
        %1494 = vmatprep.subr.bf16.mxu0 0
        %1495 = vmatpush1.bf16.xpose.msra.mxu0 %v1421
        %1496 = vmatprep.subr.bf16.mxu0 0
        %1497 = vmatpush1.bf16.xpose.msra.mxu0 %v1422
        %1498 = vmatprep.subr.bf16.mxu0 0
        %1499 = vmatpush1.bf16.xpose.msra.mxu0 %v1423
        %1500 = vmatprep.mubr.bf16.mxu0 0
        %1501 = vmatmul.mubr.bf16.gmra.mrb[0].mxu0 %v1458
        %v1502 = vpop.f32.mrb[0].mxu0
        %v1503 = vadd.f32 0.0, %v1502
        %v1504 = vpop.f32.mrb[0].mxu0
        %v1505 = vadd.f32 0.0, %v1504
        %v1506 = vpop.f32.mrb[0].mxu0
        %v1507 = vadd.f32 0.0, %v1506
        %v1508 = vpop.f32.mrb[0].mxu0
        %v1509 = vadd.f32 0.0, %v1508
        %1510 = vmatprep.mubr.bf16.mxu0 0
        %1511 = vmatmul.mubr.bf16.gmra.mrb[0].mxu0 %v1459
        %v1512 = vpop.f32.mrb[0].mxu0
        %v1513 = vadd.f32 0.0, %v1512
        %v1514 = vpop.f32.mrb[0].mxu0
        %v1515 = vadd.f32 0.0, %v1514
        %v1516 = vpop.f32.mrb[0].mxu0
        %v1517 = vadd.f32 0.0, %v1516
        %v1518 = vpop.f32.mrb[0].mxu0
        %v1519 = vadd.f32 0.0, %v1518
        %1520 = vmatprep.mubr.bf16.mxu0 0
        %1521 = vmatmul.mubr.bf16.gmra.mrb[0].mxu0 %v1460
        %v1522 = vpop.f32.mrb[0].mxu0
        %v1523 = vadd.f32 0.0, %v1522
        %v1524 = vpop.f32.mrb[0].mxu0
        %v1525 = vadd.f32 0.0, %v1524
        %v1526 = vpop.f32.mrb[0].mxu0
        %v1527 = vadd.f32 0.0, %v1526
        %v1528 = vpop.f32.mrb[0].mxu0
        %v1529 = vadd.f32 0.0, %v1528
        %1530 = vmatprep.mubr.bf16.mxu0 0
        %1531 = vmatmul.mubr.bf16.gmra.mrb[0].mxu0 %v1461
        %v1532 = vpop.f32.mrb[0].mxu0
        %v1533 = vadd.f32 0.0, %v1532
        %v1534 = vpop.f32.mrb[0].mxu0
        %v1535 = vadd.f32 0.0, %v1534
        %v1536 = vpop.f32.mrb[0].mxu0
        %v1537 = vadd.f32 0.0, %v1536
        %v1538 = vpop.f32.mrb[0].mxu0
        %v1539 = vadd.f32 0.0, %v1538
        %1540 = vmatprep.mubr.bf16.mxu0 0
        %1541 = vmatmul.mubr.bf16.gmra.mrb[0].mxu0 %v1462
        %v1542 = vpop.f32.mrb[0].mxu0
        %v1543 = vadd.f32 0.0, %v1542
        %v1544 = vpop.f32.mrb[0].mxu0
        %v1545 = vadd.f32 0.0, %v1544
        %v1546 = vpop.f32.mrb[0].mxu0
        %v1547 = vpop.f32.mrb[0].mxu0
        %1548 = vdwg.mxu0
        %1549 = vmatprep.subr.bf16.mxu0 0
        %1550 = vmatpush1.bf16.xpose.msra.mxu0 %v1424
        %1551 = vmatprep.subr.bf16.mxu0 0
        %1552 = vmatpush1.bf16.xpose.msra.mxu0 %v1425
        %1553 = vmatprep.subr.bf16.mxu0 0
        %1554 = vmatpush1.bf16.xpose.msra.mxu0 %v1426
        %1555 = vmatprep.subr.bf16.mxu0 0
        %1556 = vmatpush1.bf16.xpose.msra.mxu0 %v1427
        %1557 = vmatprep.subr.bf16.mxu0 0
        %1558 = vmatpush1.bf16.xpose.msra.mxu0 %v1428
        %1559 = vmatprep.subr.bf16.mxu0 0
        %1560 = vmatpush1.bf16.xpose.msra.mxu0 %v1429
        %1561 = vmatprep.subr.bf16.mxu0 0
        %1562 = vmatpush1.bf16.xpose.msra.mxu0 %v1430
        %1563 = vmatprep.subr.bf16.mxu0 0
        %1564 = vmatpush1.bf16.xpose.msra.mxu0 %v1431
        %1565 = vmatprep.subr.bf16.mxu0 0
        %1566 = vmatpush1.bf16.xpose.msra.mxu0 %v1432
        %1567 = vmatprep.subr.bf16.mxu0 0
        %1568 = vmatpush1.bf16.xpose.msra.mxu0 %v1433
        %1569 = vmatprep.subr.bf16.mxu0 0
        %1570 = vmatpush1.bf16.xpose.msra.mxu0 %v1434
        %1571 = vmatprep.subr.bf16.mxu0 0
        %1572 = vmatpush1.bf16.xpose.msra.mxu0 %v1435
        %1573 = vmatprep.subr.bf16.mxu0 0
        %1574 = vmatpush1.bf16.xpose.msra.mxu0 %v1436
        %1575 = vmatprep.subr.bf16.mxu0 0
        %1576 = vmatpush1.bf16.xpose.msra.mxu0 %v1437
        %1577 = vmatprep.subr.bf16.mxu0 0
        %1578 = vmatpush1.bf16.xpose.msra.mxu0 %v1438
        %1579 = vmatprep.subr.bf16.mxu0 0
        %1580 = vmatpush1.bf16.xpose.msra.mxu0 %v1439
        %1581 = vmatprep.mubr.bf16.mxu0 0
        %1582 = vmatmul.mubr.bf16.gmra.mrb[0].mxu0 %v1458
        %v1583 = vpop.f32.mrb[0].mxu0
        %v1584 = vadd.f32 0.0, %v1583
        %v1585 = vpop.f32.mrb[0].mxu0
        %v1586 = vadd.f32 0.0, %v1585
        %v1587 = vpop.f32.mrb[0].mxu0
        %v1588 = vadd.f32 0.0, %v1587
        %v1589 = vpop.f32.mrb[0].mxu0
        %v1590 = vadd.f32 0.0, %v1589
        %1591 = vmatprep.mubr.bf16.mxu0 0
        %1592 = vmatmul.mubr.bf16.gmra.mrb[0].mxu0 %v1459
        %v1593 = vpop.f32.mrb[0].mxu0
        %v1594 = vadd.f32 0.0, %v1593
        %v1595 = vpop.f32.mrb[0].mxu0
        %v1596 = vadd.f32 0.0, %v1595
        %v1597 = vpop.f32.mrb[0].mxu0
        %v1598 = vadd.f32 0.0, %v1597
        %v1599 = vpop.f32.mrb[0].mxu0
        %v1600 = vadd.f32 0.0, %v1599
        %1601 = vmatprep.mubr.bf16.mxu0 0
        %1602 = vmatmul.mubr.bf16.gmra.mrb[0].mxu0 %v1460
        %v1603 = vpop.f32.mrb[0].mxu0
        %v1604 = vadd.f32 0.0, %v1603
        %v1605 = vpop.f32.mrb[0].mxu0
        %v1606 = vadd.f32 0.0, %v1605
        %v1607 = vpop.f32.mrb[0].mxu0
        %v1608 = vadd.f32 0.0, %v1607
        %v1609 = vpop.f32.mrb[0].mxu0
        %v1610 = vadd.f32 0.0, %v1609
        %1611 = vmatprep.mubr.bf16.mxu0 0
        %1612 = vmatmul.mubr.bf16.gmra.mrb[0].mxu0 %v1461
        %v1613 = vpop.f32.mrb[0].mxu0
        %v1614 = vadd.f32 0.0, %v1613
        %v1615 = vpop.f32.mrb[0].mxu0
        %v1616 = vadd.f32 0.0, %v1615
        %v1617 = vpop.f32.mrb[0].mxu0
        %v1618 = vadd.f32 0.0, %v1617
        %v1619 = vpop.f32.mrb[0].mxu0
        %v1620 = vadd.f32 0.0, %v1619
        %1621 = vmatprep.mubr.bf16.mxu0 0
        %1622 = vmatmul.mubr.bf16.gmra.mrb[0].mxu0 %v1462
        %v1623 = vpop.f32.mrb[0].mxu0
        %v1624 = vadd.f32 0.0, %v1623
        %v1625 = vpop.f32.mrb[0].mxu0
        %v1626 = vadd.f32 0.0, %v1625
        %v1627 = vpop.f32.mrb[0].mxu0
        %v1628 = vpop.f32.mrb[0].mxu0
        %1629 = vdwg.mxu0
        %v1630 = vrcp.pop %v1543
        %v1631 = vrcp.pop %v1545
        %v1632 = vrcp.pop %v1624
        %v1633 = vrcp.pop %v1626
        %v1634 = vlaneseq
        %v1635 = vshrl.u32 %v1634, 7
        %v1636 = vsub.s32 0, %v1635
        %v1637 = vrot.slane %v1630, %v1636
        %v1638 = vlaneseq
        %v1639 = vshrl.u32 %v1638, 7
        %v1640 = vsub.s32 0, %v1639
        %v1641 = vrot.slane %v1631, %v1640
        %v1642 = vlaneseq
        %v1643 = vshrl.u32 %v1642, 7
        %v1644 = vsub.s32 0, %v1643
        %v1645 = vrot.slane %v1632, %v1644
        %v1646 = vlaneseq
        %v1647 = vshrl.u32 %v1646, 7
        %v1648 = vsub.s32 0, %v1647
        %v1649 = vrot.slane %v1633, %v1648
        %v1650 = vmul.f32 %v1503, %v1637
        %v1651 = vmul.f32 %v1505, %v1641
        %v1652 = vmul.f32 %v1584, %v1645
        %v1653 = vmul.f32 %v1586, %v1649
        %v1654 = vmul.f32 %v1507, %v1637
        %v1655 = vmul.f32 %v1509, %v1641
        %v1656 = vmul.f32 %v1588, %v1645
        %v1657 = vmul.f32 %v1590, %v1649
        %v1658 = vmul.f32 %v1513, %v1637
        %v1659 = vmul.f32 %v1515, %v1641
        %v1660 = vmul.f32 %v1594, %v1645
        %v1661 = vmul.f32 %v1596, %v1649
        %v1662 = vmul.f32 %v1517, %v1637
        %v1663 = vmul.f32 %v1519, %v1641
        %v1664 = vmul.f32 %v1598, %v1645
        %v1665 = vmul.f32 %v1600, %v1649
        %v1666 = vmul.f32 %v1523, %v1637
        %v1667 = vmul.f32 %v1525, %v1641
        %v1668 = vmul.f32 %v1604, %v1645
        %v1669 = vmul.f32 %v1606, %v1649
        %v1670 = vmul.f32 %v1527, %v1637
        %v1671 = vmul.f32 %v1529, %v1641
        %v1672 = vmul.f32 %v1608, %v1645
        %v1673 = vmul.f32 %v1610, %v1649
        %v1674 = vmul.f32 %v1533, %v1637
        %v1675 = vmul.f32 %v1535, %v1641
        %v1676 = vmul.f32 %v1614, %v1645
        %v1677 = vmul.f32 %v1616, %v1649
        %v1678 = vmul.f32 %v1537, %v1637
        %v1679 = vmul.f32 %v1539, %v1641
        %v1680 = vmul.f32 %v1618, %v1645
        %v1681 = vmul.f32 %v1620, %v1649
        %v1682 = vmul.f32 %v1650, %v1650
        %v1683 = vmul.f32 %v1651, %v1651
        %v1684 = vmul.f32 %v1652, %v1652
        %v1685 = vmul.f32 %v1653, %v1653
        %v1686 = vmul.f32 %v1654, %v1654
        %v1687 = vmul.f32 %v1655, %v1655
        %v1688 = vmul.f32 %v1656, %v1656
        %v1689 = vmul.f32 %v1657, %v1657
        %v1690 = vmul.f32 %v1658, %v1658
        %v1691 = vmul.f32 %v1659, %v1659
        %v1692 = vmul.f32 %v1660, %v1660
        %v1693 = vmul.f32 %v1661, %v1661
        %v1694 = vmul.f32 %v1662, %v1662
        %v1695 = vmul.f32 %v1663, %v1663
        %v1696 = vmul.f32 %v1664, %v1664
        %v1697 = vmul.f32 %v1665, %v1665
        %v1698 = vsub.f32 %v1666, %v1682
        %v1699 = vsub.f32 %v1667, %v1683
        %v1700 = vsub.f32 %v1668, %v1684
        %v1701 = vsub.f32 %v1669, %v1685
        %v1702 = vsub.f32 %v1670, %v1686
        %v1703 = vsub.f32 %v1671, %v1687
        %v1704 = vsub.f32 %v1672, %v1688
        %v1705 = vsub.f32 %v1673, %v1689
        %v1706 = vsub.f32 %v1674, %v1690
        %v1707 = vsub.f32 %v1675, %v1691
        %v1708 = vsub.f32 %v1676, %v1692
        %v1709 = vsub.f32 %v1677, %v1693
        %v1710 = vsub.f32 %v1678, %v1694
        %v1711 = vsub.f32 %v1679, %v1695
        %v1712 = vsub.f32 %v1680, %v1696
        %v1713 = vsub.f32 %v1681, %v1697
        %v1714 = vmax.f32 %v1698, 0.0
        %v1715 = vmax.f32 %v1699, 0.0
        %v1716 = vmax.f32 %v1700, 0.0
        %v1717 = vmax.f32 %v1701, 0.0
        %v1718 = vmax.f32 %v1702, 0.0
        %v1719 = vmax.f32 %v1703, 0.0
        %v1720 = vmax.f32 %v1704, 0.0
        %v1721 = vmax.f32 %v1705, 0.0
        %v1722 = vmax.f32 %v1706, 0.0
        %v1723 = vmax.f32 %v1707, 0.0
        %v1724 = vmax.f32 %v1708, 0.0
        %v1725 = vmax.f32 %v1709, 0.0
        %v1726 = vmax.f32 %v1710, 0.0
        %v1727 = vmax.f32 %v1711, 0.0
        %v1728 = vmax.f32 %v1712, 0.0
        %v1729 = vmax.f32 %v1713, 0.0
        %v1730 = vrsqrt.pop %v1714
        %v1731 = vmul.f32 %v1714, %v1730
        %vm1732 = vcmp.eq.f32.partialorder %v1714, inf
        %v1733 = vsel %vm1732, %v1714, %v1731
        %vm1734 = vcmp.eq.f32.partialorder %v1714, 0.0
        %v1735 = vand.u32 %v1714, 2147483648
        %v1736 = vsel %vm1734, %v1735, %v1733
        %v1737 = vrsqrt.pop %v1715
        %v1738 = vmul.f32 %v1715, %v1737
        %vm1739 = vcmp.eq.f32.partialorder %v1715, inf
        %v1740 = vsel %vm1739, %v1715, %v1738
        %vm1741 = vcmp.eq.f32.partialorder %v1715, 0.0
        %v1742 = vand.u32 %v1715, 2147483648
        %v1743 = vsel %vm1741, %v1742, %v1740
        %v1744 = vrsqrt.pop %v1716
        %v1745 = vmul.f32 %v1716, %v1744
        %vm1746 = vcmp.eq.f32.partialorder %v1716, inf
        %v1747 = vsel %vm1746, %v1716, %v1745
        %vm1748 = vcmp.eq.f32.partialorder %v1716, 0.0
        %v1749 = vand.u32 %v1716, 2147483648
        %v1750 = vsel %vm1748, %v1749, %v1747
        %v1751 = vrsqrt.pop %v1717
        %v1752 = vmul.f32 %v1717, %v1751
        %vm1753 = vcmp.eq.f32.partialorder %v1717, inf
        %v1754 = vsel %vm1753, %v1717, %v1752
        %vm1755 = vcmp.eq.f32.partialorder %v1717, 0.0
        %v1756 = vand.u32 %v1717, 2147483648
        %v1757 = vsel %vm1755, %v1756, %v1754
        %v1758 = vrsqrt.pop %v1718
        %v1759 = vmul.f32 %v1718, %v1758
        %vm1760 = vcmp.eq.f32.partialorder %v1718, inf
        %v1761 = vsel %vm1760, %v1718, %v1759
        %vm1762 = vcmp.eq.f32.partialorder %v1718, 0.0
        %v1763 = vand.u32 %v1718, 2147483648
        %v1764 = vsel %vm1762, %v1763, %v1761
        %v1765 = vrsqrt.pop %v1719
        %v1766 = vmul.f32 %v1719, %v1765
        %vm1767 = vcmp.eq.f32.partialorder %v1719, inf
        %v1768 = vsel %vm1767, %v1719, %v1766
        %vm1769 = vcmp.eq.f32.partialorder %v1719, 0.0
        %v1770 = vand.u32 %v1719, 2147483648
        %v1771 = vsel %vm1769, %v1770, %v1768
        %v1772 = vrsqrt.pop %v1720
        %v1773 = vmul.f32 %v1720, %v1772
        %vm1774 = vcmp.eq.f32.partialorder %v1720, inf
        %v1775 = vsel %vm1774, %v1720, %v1773
        %vm1776 = vcmp.eq.f32.partialorder %v1720, 0.0
        %v1777 = vand.u32 %v1720, 2147483648
        %v1778 = vsel %vm1776, %v1777, %v1775
        %v1779 = vrsqrt.pop %v1721
        %v1780 = vmul.f32 %v1721, %v1779
        %vm1781 = vcmp.eq.f32.partialorder %v1721, inf
        %v1782 = vsel %vm1781, %v1721, %v1780
        %vm1783 = vcmp.eq.f32.partialorder %v1721, 0.0
        %v1784 = vand.u32 %v1721, 2147483648
        %v1785 = vsel %vm1783, %v1784, %v1782
        %v1786 = vrsqrt.pop %v1722
        %v1787 = vmul.f32 %v1722, %v1786
        %vm1788 = vcmp.eq.f32.partialorder %v1722, inf
        %v1789 = vsel %vm1788, %v1722, %v1787
        %vm1790 = vcmp.eq.f32.partialorder %v1722, 0.0
        %v1791 = vand.u32 %v1722, 2147483648
        %v1792 = vsel %vm1790, %v1791, %v1789
        %v1793 = vrsqrt.pop %v1723
        %v1794 = vmul.f32 %v1723, %v1793
        %vm1795 = vcmp.eq.f32.partialorder %v1723, inf
        %v1796 = vsel %vm1795, %v1723, %v1794
        %vm1797 = vcmp.eq.f32.partialorder %v1723, 0.0
        %v1798 = vand.u32 %v1723, 2147483648
        %v1799 = vsel %vm1797, %v1798, %v1796
        %v1800 = vrsqrt.pop %v1724
        %v1801 = vmul.f32 %v1724, %v1800
        %vm1802 = vcmp.eq.f32.partialorder %v1724, inf
        %v1803 = vsel %vm1802, %v1724, %v1801
        %vm1804 = vcmp.eq.f32.partialorder %v1724, 0.0
        %v1805 = vand.u32 %v1724, 2147483648
        %v1806 = vsel %vm1804, %v1805, %v1803
        %v1807 = vrsqrt.pop %v1725
        %v1808 = vmul.f32 %v1725, %v1807
        %vm1809 = vcmp.eq.f32.partialorder %v1725, inf
        %v1810 = vsel %vm1809, %v1725, %v1808
        %vm1811 = vcmp.eq.f32.partialorder %v1725, 0.0
        %v1812 = vand.u32 %v1725, 2147483648
        %v1813 = vsel %vm1811, %v1812, %v1810
        %v1814 = vrsqrt.pop %v1726
        %v1815 = vmul.f32 %v1726, %v1814
        %vm1816 = vcmp.eq.f32.partialorder %v1726, inf
        %v1817 = vsel %vm1816, %v1726, %v1815
        %vm1818 = vcmp.eq.f32.partialorder %v1726, 0.0
        %v1819 = vand.u32 %v1726, 2147483648
        %v1820 = vsel %vm1818, %v1819, %v1817
        %v1821 = vrsqrt.pop %v1727
        %v1822 = vmul.f32 %v1727, %v1821
        %vm1823 = vcmp.eq.f32.partialorder %v1727, inf
        %v1824 = vsel %vm1823, %v1727, %v1822
        %vm1825 = vcmp.eq.f32.partialorder %v1727, 0.0
        %v1826 = vand.u32 %v1727, 2147483648
        %v1827 = vsel %vm1825, %v1826, %v1824
        %v1828 = vrsqrt.pop %v1728
        %v1829 = vmul.f32 %v1728, %v1828
        %vm1830 = vcmp.eq.f32.partialorder %v1728, inf
        %v1831 = vsel %vm1830, %v1728, %v1829
        %vm1832 = vcmp.eq.f32.partialorder %v1728, 0.0
        %v1833 = vand.u32 %v1728, 2147483648
        %v1834 = vsel %vm1832, %v1833, %v1831
        %v1835 = vrsqrt.pop %v1729
        %v1836 = vmul.f32 %v1729, %v1835
        %vm1837 = vcmp.eq.f32.partialorder %v1729, inf
        %v1838 = vsel %vm1837, %v1729, %v1836
        %vm1839 = vcmp.eq.f32.partialorder %v1729, 0.0
        %v1840 = vand.u32 %v1729, 2147483648
        %v1841 = vsel %vm1839, %v1840, %v1838
        %v1842 = vld [vmem:[%s429] sm:$0xff]
        %v1843 = vld [vmem:[%s429 + $0x8] sm:$0xff]
        %v1844 = vld [vmem:[%s429 + $0x10] sm:$0xff]
        %v1845 = vld [vmem:[%s429 + $0x18] sm:$0xff]
        %1847 = vset.pattern.permute.xlu0 0
        %1848 = vperm.xlu0 %1847, %v1842
        %v1849 = vpop.permute.xlu0 %1848
        %1852 = vset.pattern.permute.xlu0 0
        %1853 = vperm.xlu0 %1852, %v1843
        %v1854 = vpop.permute.xlu0 %1853
        %1857 = vset.pattern.permute.xlu0 0
        %1858 = vperm.xlu0 %1857, %v1844
        %v1859 = vpop.permute.xlu0 %1858
        %1862 = vset.pattern.permute.xlu0 0
        %1863 = vperm.xlu0 %1862, %v1845
        %v1864 = vpop.permute.xlu0 %1863
        %v1866 = vsub.f32 %v514, %v1849
        %v1867 = vsub.f32 %v515, %v1849
        %v1868 = vsub.f32 %v516, %v1849
        %v1869 = vsub.f32 %v517, %v1849
        %v1870 = vsub.f32 %v518, %v1854
        %v1871 = vsub.f32 %v519, %v1854
        %v1872 = vsub.f32 %v520, %v1854
        %v1873 = vsub.f32 %v521, %v1854
        %v1874 = vsub.f32 %v522, %v1859
        %v1875 = vsub.f32 %v523, %v1859
        %v1876 = vsub.f32 %v524, %v1859
        %v1877 = vsub.f32 %v525, %v1859
        %v1878 = vsub.f32 %v526, %v1864
        %v1879 = vsub.f32 %v527, %v1864
        %v1880 = vsub.f32 %v528, %v1864
        %v1881 = vsub.f32 %v529, %v1864
        %v1882 = vld [vmem:[%s434] sm:$0xff]
        %v1883 = vld [vmem:[%s434 + $0x8] sm:$0xff]
        %v1884 = vld [vmem:[%s434 + $0x10] sm:$0xff]
        %v1885 = vld [vmem:[%s434 + $0x18] sm:$0xff]
        %1887 = vset.pattern.permute.xlu0 0
        %1888 = vperm.xlu0 %1887, %v1882
        %v1889 = vpop.permute.xlu0 %1888
        %1892 = vset.pattern.permute.xlu0 0
        %1893 = vperm.xlu0 %1892, %v1883
        %v1894 = vpop.permute.xlu0 %1893
        %1897 = vset.pattern.permute.xlu0 0
        %1898 = vperm.xlu0 %1897, %v1884
        %v1899 = vpop.permute.xlu0 %1898
        %1902 = vset.pattern.permute.xlu0 0
        %1903 = vperm.xlu0 %1902, %v1885
        %v1904 = vpop.permute.xlu0 %1903
        %v1906 = vmul.f32 %v1866, %v1889
        %v1907 = vmul.f32 %v1867, %v1889
        %v1908 = vmul.f32 %v1868, %v1889
        %v1909 = vmul.f32 %v1869, %v1889
        %v1910 = vmul.f32 %v1870, %v1894
        %v1911 = vmul.f32 %v1871, %v1894
        %v1912 = vmul.f32 %v1872, %v1894
        %v1913 = vmul.f32 %v1873, %v1894
        %v1914 = vmul.f32 %v1874, %v1899
        %v1915 = vmul.f32 %v1875, %v1899
        %v1916 = vmul.f32 %v1876, %v1899
        %v1917 = vmul.f32 %v1877, %v1899
        %v1918 = vmul.f32 %v1878, %v1904
        %v1919 = vmul.f32 %v1879, %v1904
        %v1920 = vmul.f32 %v1880, %v1904
        %v1921 = vmul.f32 %v1881, %v1904
        %v1922 = vmul.f32 %v1736, %v1906
        %v1923 = vmul.f32 %v1743, %v1907
        %v1924 = vmul.f32 %v1750, %v1908
        %v1925 = vmul.f32 %v1757, %v1909
        %v1926 = vmul.f32 %v1764, %v1910
        %v1927 = vmul.f32 %v1771, %v1911
        %v1928 = vmul.f32 %v1778, %v1912
        %v1929 = vmul.f32 %v1785, %v1913
        %v1930 = vmul.f32 %v1792, %v1914
        %v1931 = vmul.f32 %v1799, %v1915
        %v1932 = vmul.f32 %v1806, %v1916
        %v1933 = vmul.f32 %v1813, %v1917
        %v1934 = vmul.f32 %v1820, %v1918
        %v1935 = vmul.f32 %v1827, %v1919
        %v1936 = vmul.f32 %v1834, %v1920
        %v1937 = vmul.f32 %v1841, %v1921
        %v1938 = vadd.f32 %v1922, %v1650
        %v1939 = vadd.f32 %v1923, %v1651
        %v1940 = vadd.f32 %v1924, %v1652
        %v1941 = vadd.f32 %v1925, %v1653
        %v1942 = vadd.f32 %v1926, %v1654
        %v1943 = vadd.f32 %v1927, %v1655
        %v1944 = vadd.f32 %v1928, %v1656
        %v1945 = vadd.f32 %v1929, %v1657
        %v1946 = vadd.f32 %v1930, %v1658
        %v1947 = vadd.f32 %v1931, %v1659
        %v1948 = vadd.f32 %v1932, %v1660
        %v1949 = vadd.f32 %v1933, %v1661
        %v1950 = vadd.f32 %v1934, %v1662
        %v1951 = vadd.f32 %v1935, %v1663
        %v1952 = vadd.f32 %v1936, %v1664
        %v1953 = vadd.f32 %v1937, %v1665
        %1954 = vst [vmem:[%s403] sm:$0xff] %v1938
        %1955 = vst [vmem:[%s403 + $0x8] sm:$0xff] %v1939
        %1956 = vst [vmem:[%s403 + $0x10] sm:$0xff] %v1940
        %1957 = vst [vmem:[%s403 + $0x18] sm:$0xff] %v1941
        %1958 = vst [vmem:[%s403 + $0x20] sm:$0xff] %v1942
        %1959 = vst [vmem:[%s403 + $0x28] sm:$0xff] %v1943
        %1960 = vst [vmem:[%s403 + $0x30] sm:$0xff] %v1944
        %1961 = vst [vmem:[%s403 + $0x38] sm:$0xff] %v1945
        %1962 = vst [vmem:[%s403 + $0x40] sm:$0xff] %v1946
        %1963 = vst [vmem:[%s403 + $0x48] sm:$0xff] %v1947
        %1964 = vst [vmem:[%s403 + $0x50] sm:$0xff] %v1948
        %1965 = vst [vmem:[%s403 + $0x58] sm:$0xff] %v1949
        %1966 = vst [vmem:[%s403 + $0x60] sm:$0xff] %v1950
        %1967 = vst [vmem:[%s403 + $0x68] sm:$0xff] %v1951
        %1968 = vst [vmem:[%s403 + $0x70] sm:$0xff] %v1952
        %1969 = vst [vmem:[%s403 + $0x78] sm:$0xff] %v1953
        %s1970 = sand.u32 %s202, 1
        %s1971 = scalar_lea.sflag [#allocation4], %s1970
        %s1972 = sand.u32 %s202, 1
        %s1973 = smul.addr %s1972, 128
        %s1974 = scalar_lea.vmem [#allocation3], %s1973
        // Predicated region
        $region68: #{tpu_custom_call.1} parent=62 // pred_check
          %p1975 = pneg %p212
        $region69: #{tpu_custom_call.1} parent=62 // pred_check_branch
          %1977 = sbr.rel (%p1975) target = $region71
        $region70: #{tpu_custom_call.1} parent=62 // pred_region
          %s1978 = smul.u32 4, %s25
          %s1980 = ssub.s32 2048, 2048
          %1981 = vsyncadd %s1971, %s1980
          %s1982 = smul.addr %s24, 32
          %s1983 = sadd.s32 %s1978, %s1982
          %s1984 = smul.addr %s1983, 128
          %s1985 = scalar_lea.hbm %s6, %s1984
          %s1986 = sshll.u32 %s1974, 4
          %s1987 = int_to_ptr.vmem [resolvable:$true] %s1986
          %1992 = dma.vmem_to_hbm [thread:$0]  %s1987, 2048, %s1985, %s1971, 512, 1024, 32
        $region71: #{tpu_custom_call.1} parent=62 // pred_fallthru
          _
      $region63: #{tpu_custom_call.1} parent=5 // pred_fallthru
        _
      %p1993 = scmp.le.s32.totalorder 2, %s15
      // Predicated region
      $region72: #{tpu_custom_call.1} parent=5 // pred_check
        %p1994 = pneg %p1993
      $region73: #{tpu_custom_call.1} parent=5 // pred_check_branch
        %1996 = sbr.rel (%p1994) target = $region75
      $region74: #{tpu_custom_call.1} parent=5 // pred_region
        %s1997 = ssub.s32 %s15, 2
        // Predicated region
        $region76: #{tpu_custom_call.1} parent=74 // pred_check
          %p1998 = pneg %p218
        $region77: #{tpu_custom_call.1} parent=74 // pred_check_branch
          %2000 = sbr.rel (%p1998) target = $region79
        $region78: #{tpu_custom_call.1} parent=74 // pred_region
          %s2001 = sand.u32 %s203, 1
          %s2002 = scalar_lea.sflag [#allocation4], %s2001
          %s2003 = sand.u32 %s203, 1
          %s2004 = smul.addr %s2003, 128
          %s2005 = scalar_lea.vmem [#allocation3], %s2004
          %2006 = dma.done %s2002, 2048
        $region79: #{tpu_custom_call.1} parent=74 // pred_fallthru
          _
      $region75: #{tpu_custom_call.1} parent=5 // pred_fallthru
        _
    $region6: #{tpu_custom_call.1} parent=1 // loop_footer
      %s19 = sadd.s32 1, %s15
    $region7: #{tpu_custom_call.1} parent=1 // loop_footer_branch
      %14 = sbr.rel target = $region3
    $region8: #{tpu_custom_call.1} parent=1 // loop_exit
      _
    %2007 = vsyncpa [#allocation4], 1
    %s2008 = scalar_lea.sflag [#allocation4], 1
    %2009 = vsyncpa %s2008, 1

</llo_original>
